<compile_context>
chip_gen: v5e
topology: v5e:2x2
jax: 0.10.0
libtpu: 0.0.40
codegen_flags: <defaults>
</compile_context>

<pallas_src>
import jax
import jax.numpy as jnp
import numpy as np
from jax import lax
from jax.experimental import pallas as pl
from jax.experimental.pallas import tpu as pltpu


EXPANSION = 4
BN_EPS = 1e-5


def _bottleneck_kernel(x_ref, w1_ref, b1_ref, w2_ref, b2_ref,
                       w3_ref, b3_ref, o_ref):
    # One grid step == one batch element (NHWC tile), x in bf16.
    H, W, Cin = x_ref.shape[1], x_ref.shape[2], x_ref.shape[3]
    P = w1_ref.shape[1]            # planes
    Cout = w3_ref.shape[1]         # planes * expansion (== Cin here)

    # ---- conv1 (1x1, BN1 scale folded into w1) + bias + ReLU -------------
    xm = x_ref[0].reshape(H * W, Cin)                       # bf16
    h1 = jnp.dot(xm, w1_ref[...], preferred_element_type=jnp.float32)
    h1 = jnp.maximum(h1 + b1_ref[...], 0.0).reshape(H, W, P)   # f32

    # ---- conv2 (3x3, stride=1, pad=1, BN2 scale folded into w2) ----------
    # ONE im2col matmul with K = 9*P.  Build the three W-shifted variants
    # first (2 XLU rolls + 2 VPU selects total, masks precomputed), cast each
    # variant to bf16 once, then derive the nine taps by slice+concat
    # H-shifts along the untiled leading axis.
    wx = lax.broadcasted_iota(jnp.int32, (H, W, P), 1)      # x coordinate
    not_first = wx >= 1                                     # x-1 exists
    not_last = wx < (W - 1)                                 # x+1 exists

    # variant[:, x] = h1[:, x + dx] with zero at the padded edge.
    h1_m = jnp.where(not_first, pltpu.roll(h1, shift=1, axis=1), 0.0)     # dx = -1
    h1_p = jnp.where(not_last, pltpu.roll(h1, shift=W - 1, axis=1), 0.0)  # dx = +1
    w_variants = (h1_m.astype(jnp.bfloat16),    # kx = 0
                  h1.astype(jnp.bfloat16),      # kx = 1
                  h1_p.astype(jnp.bfloat16))    # kx = 2

    zrow = jnp.zeros((1, W, P), jnp.bfloat16)

    def shift_h(a, dy):            # result[y] = a[y + dy], zero at edges
        if dy == -1:
            return jnp.concatenate([zrow, a[:-1]], axis=0)
        if dy == 1:
            return jnp.concatenate([a[1:], zrow], axis=0)
        return a

    # Channel order (ky, kx, cin) must match the (9*P, P) reshape of w2.
    taps = [shift_h(v, dy) for dy in (-1, 0, 1) for v in w_variants]
    im2col = jnp.concatenate(taps, axis=-1).reshape(H * W, 9 * P)   # bf16
    h2 = jnp.dot(im2col, w2_ref[...], preferred_element_type=jnp.float32)
    h2 = jnp.maximum(h2 + b2_ref[...], 0.0)                 # (H*W, P) f32

    # ---- conv3 (1x1, BN3 scale folded into w3) + bias + residual + ReLU --
    h3 = jnp.dot(h2.astype(jnp.bfloat16), w3_ref[...],
                 preferred_element_type=jnp.float32) + b3_ref[...]
    res = x_ref[0].reshape(H * W, Cout).astype(jnp.float32)   # residual, short live range
    out = jnp.maximum(h3 + res, 0.0)
    o_ref[0] = out.reshape(H, W, Cout).astype(o_ref.dtype)


def _fold_bn(gamma, beta, mean, var, eps=BN_EPS):
    scale = gamma / jnp.sqrt(var + eps)
    bias = beta - mean * scale
    return scale, bias


def _prepare_folded(params):
    """Fold BN scales into the conv weights (f32), cast matmul operands to bf16."""
    w1, bn1, w2, bn2, w3, bn3 = (params["w1"], params["bn1"], params["w2"],
                                 params["bn2"], params["w3"], params["bn3"])
    s1, c1 = _fold_bn(*bn1)
    s2, c2 = _fold_bn(*bn2)
    s3, c3 = _fold_bn(*bn3)
    w1_mat = (jnp.transpose(w1[:, :, 0, 0], (1, 0)) * s1[None, :]
              ).astype(jnp.bfloat16)                               # (Cin, P)
    w2_khw = (jnp.transpose(w2, (2, 3, 1, 0)) * s2[None, None, None, :]
              ).astype(jnp.bfloat16)                               # (3,3,Pin,Pout) HWIO
    w3_mat = (jnp.transpose(w3[:, :, 0, 0], (1, 0)) * s3[None, :]
              ).astype(jnp.bfloat16)                               # (P, Cout)
    b1 = c1.reshape(1, -1).astype(jnp.float32)
    b2 = c2.reshape(1, -1).astype(jnp.float32)
    b3 = c3.reshape(1, -1).astype(jnp.float32)
    return w1_mat, b1, w2_khw, b2, w3_mat, b3


def bottleneck_pallas(x_nchw, params):
    """Runs the Bottleneck block. x_nchw: (N, Cin, H, W) float32."""
    N, Cin, H, W = x_nchw.shape
    w1_mat, b1, w2_khw, b2, w3_mat, b3 = _prepare_folded(params)
    P = w1_mat.shape[1]
    Cout = w3_mat.shape[1]
    assert Cout == Cin, "stride=1 / no-downsample instance requires Cin == planes*4"

    # NCHW -> NHWC, bf16 activations (halves input DMA bytes + VMEM footprint).
    # TODO(synk): in a full ResNet stack keep activations NHWC/bf16 end-to-end
    # so these boundary transposes/casts disappear.
    x = jnp.transpose(x_nchw, (0, 2, 3, 1)).astype(jnp.bfloat16)

    # Flatten w2 to the (9*P, P) im2col layout, order (ky, kx, cin).
    w2_mat = w2_khw.reshape(9 * P, P)

    # Constant operands: untiled, one VMEM copy for the whole grid
    # (no per-step re-staging, no double-buffering).
    vmem = pl.BlockSpec(memory_space=pltpu.MemorySpace.VMEM)

    out = pl.pallas_call(
        _bottleneck_kernel,
        out_shape=jax.ShapeDtypeStruct((N, H, W, Cout), jnp.float32),
        grid_spec=pltpu.PrefetchScalarGridSpec(
            num_scalar_prefetch=0,
            grid=(N,),
            in_specs=[
                pl.BlockSpec((1, H, W, Cin), lambda b: (b, 0, 0, 0)),  # x
                vmem, vmem,    # conv1 weight / bias
                vmem, vmem,    # conv2 weight / bias
                vmem, vmem,    # conv3 weight / bias
            ],
            out_specs=pl.BlockSpec((1, H, W, Cout), lambda b: (b, 0, 0, 0)),
        ),
        compiler_params=pltpu.CompilerParams(
            dimension_semantics=("parallel",),
            vmem_limit_bytes=32 * 1024 * 1024),
    )(x, w1_mat, b1, w2_mat, b2, w3_mat, b3)

    # NHWC -> NCHW
    return jnp.transpose(out, (0, 3, 1, 2))


# ------------------------- references -----------------------------------
def _conv_nchw(x, w, stride=1, padding=0):
    return lax.conv_general_dilated(
        x, w, (stride, stride), [(padding, padding)] * 2,
        dimension_numbers=("NCHW", "OIHW", "NCHW"))


def _bn_nchw(x, gamma, beta, mean, var, eps=BN_EPS):
    scale = (gamma / jnp.sqrt(var + eps)).reshape(1, -1, 1, 1)
    bias = (beta - mean * gamma / jnp.sqrt(var + eps)).reshape(1, -1, 1, 1)
    return x * scale + bias


def bottleneck_reference_f32(x, params):
    """Pure-f32 reference following the PyTorch module exactly."""
    w1, bn1, w2, bn2, w3, bn3 = (params["w1"], params["bn1"], params["w2"],
                                 params["bn2"], params["w3"], params["bn3"])
    residual = x
    out = jax.nn.relu(_bn_nchw(_conv_nchw(x, w1), *bn1))
    out = jax.nn.relu(_bn_nchw(_conv_nchw(out, w2, stride=1, padding=1), *bn2))
    out = _bn_nchw(_conv_nchw(out, w3), *bn3)
    return jax.nn.relu(out + residual)


def bottleneck_reference_matched(x_nchw, params):
    """Reference with the kernel's exact numerics: BN folded, bf16 operands,
    f32 accumulation — used for a tight correctness check."""
    w1_mat, b1, w2_khw, b2, w3_mat, b3 = _prepare_folded(params)
    x = jnp.transpose(x_nchw, (0, 2, 3, 1)).astype(jnp.bfloat16)       # NHWC bf16
    h1 = jnp.einsum("nhwc,cp->nhwp", x, w1_mat,
                    preferred_element_type=jnp.float32)
    h1 = jax.nn.relu(h1 + b1)
    h2 = lax.conv_general_dilated(
        h1.astype(jnp.bfloat16), w2_khw, (1, 1), [(1, 1), (1, 1)],
        dimension_numbers=("NHWC", "HWIO", "NHWC"),
        preferred_element_type=jnp.float32)
    h2 = jax.nn.relu(h2 + b2)
    h3 = jnp.einsum("nhwp,pc->nhwc", h2.astype(jnp.bfloat16), w3_mat,
                    preferred_element_type=jnp.float32) + b3
    out = jax.nn.relu(h3 + x.astype(jnp.float32))
    return jnp.transpose(out, (0, 3, 1, 2))


# ------------------------------- main ------------------------------------
if __name__ == "__main__":
    key = jax.random.PRNGKey(0)
    N, planes, H, W = 2, 4, 16, 16
    inplanes = planes * EXPANSION        # 16, residual adds without downsample

    ks = jax.random.split(key, 16)
    params = {
        "w1": jax.random.normal(ks[0], (planes, inplanes, 1, 1), jnp.float32) * 0.1,
        "w2": jax.random.normal(ks[1], (planes, planes, 3, 3), jnp.float32) * 0.1,
        "w3": jax.random.normal(ks[2], (planes * EXPANSION, planes, 1, 1), jnp.float32) * 0.1,
        "bn1": (jax.random.uniform(ks[3], (planes,), jnp.float32, 0.5, 1.5),
                jax.random.normal(ks[4], (planes,), jnp.float32) * 0.1,
                jax.random.normal(ks[5], (planes,), jnp.float32) * 0.1,
                jax.random.uniform(ks[6], (planes,), jnp.float32, 0.5, 1.5)),
        "bn2": (jax.random.uniform(ks[7], (planes,), jnp.float32, 0.5, 1.5),
                jax.random.normal(ks[8], (planes,), jnp.float32) * 0.1,
                jax.random.normal(ks[9], (planes,), jnp.float32) * 0.1,
                jax.random.uniform(ks[10], (planes,), jnp.float32, 0.5, 1.5)),
        "bn3": (jax.random.uniform(ks[11], (planes * EXPANSION,), jnp.float32, 0.5, 1.5),
                jax.random.normal(ks[12], (planes * EXPANSION,), jnp.float32) * 0.1,
                jax.random.normal(ks[13], (planes * EXPANSION,), jnp.float32) * 0.1,
                jax.random.uniform(ks[14], (planes * EXPANSION,), jnp.float32, 0.5, 1.5)),
    }

    x = jax.random.normal(ks[15], (N, inplanes, H, W), jnp.float32)

    out = jax.block_until_ready(bottleneck_pallas(x, params))

    # Tight check vs a reference using the kernel's exact numerics
    # (bf16 operands, f32 accumulation, folded BN).
    ref_matched = jax.block_until_ready(bottleneck_reference_matched(x, params))
    np.testing.assert_allclose(np.asarray(out), np.asarray(ref_matched),
                               rtol=1e-2, atol=1e-2)

    # Loose sanity check vs the pure-f32 PyTorch-equivalent reference
    # (tolerance accounts for bf16 MXU operands).
    ref_f32 = jax.block_until_ready(bottleneck_reference_f32(x, params))
    np.testing.assert_allclose(np.asarray(out), np.asarray(ref_f32),
                               rtol=5e-2, atol=5e-2)

    print("KERNEL_OK")
</pallas_src>

<mosaic_0001>
module attributes {stable_mosaic.version = 11 : i64} {
  func.func @_bottleneck_kernel(%arg0: i32, %arg1: memref<1x16x16x16xbf16, #tpu.memory_space<vmem>>, %arg2: memref<16x4xbf16, #tpu.memory_space<vmem>>, %arg3: memref<1x4xf32, #tpu.memory_space<vmem>>, %arg4: memref<36x4xbf16, #tpu.memory_space<vmem>>, %arg5: memref<1x4xf32, #tpu.memory_space<vmem>>, %arg6: memref<4x16xbf16, #tpu.memory_space<vmem>>, %arg7: memref<1x16xf32, #tpu.memory_space<vmem>>, %arg8: memref<1x16x16x16xf32, #tpu.memory_space<vmem>>) attributes {dimension_semantics = [#tpu.dimension_semantics<parallel>], iteration_bounds = array<i64: 2>, scalar_prefetch = 0 : i64, scratch_operands = 0 : i64, tpu.core_type = #tpu.core_type<tc>, window_params = [{transform_indices = @transform_0, window_bounds = array<i64: 1, 16, 16, 16>}, {pipeline_mode = #tpu.pipeline_mode<synchronous>, transform_indices = @transform_1, window_bounds = array<i64: 16, 4>}, {pipeline_mode = #tpu.pipeline_mode<synchronous>, transform_indices = @transform_2, window_bounds = array<i64: 1, 4>}, {pipeline_mode = #tpu.pipeline_mode<synchronous>, transform_indices = @transform_3, window_bounds = array<i64: 36, 4>}, {pipeline_mode = #tpu.pipeline_mode<synchronous>, transform_indices = @transform_4, window_bounds = array<i64: 1, 4>}, {pipeline_mode = #tpu.pipeline_mode<synchronous>, transform_indices = @transform_5, window_bounds = array<i64: 4, 16>}, {pipeline_mode = #tpu.pipeline_mode<synchronous>, transform_indices = @transform_6, window_bounds = array<i64: 1, 16>}, {transform_indices = @transform_7, window_bounds = array<i64: 1, 16, 16, 16>}]} {
    %c0 = arith.constant 0 : index
    %c0_0 = arith.constant 0 : index
    %c0_1 = arith.constant 0 : index
    %c0_2 = arith.constant 0 : index
    %0 = vector.load %arg1[%c0, %c0_0, %c0_1, %c0_2] : memref<1x16x16x16xbf16, #tpu.memory_space<vmem>>, vector<1x16x16x16xbf16>
    %1 = vector.shape_cast %0 : vector<1x16x16x16xbf16> to vector<16x16x16xbf16>
    %2 = vector.shape_cast %1 : vector<16x16x16xbf16> to vector<256x16xbf16>
    %c0_3 = arith.constant 0 : index
    %c0_4 = arith.constant 0 : index
    %3 = vector.load %arg2[%c0_3, %c0_4] : memref<16x4xbf16, #tpu.memory_space<vmem>>, vector<16x4xbf16>
    %cst = arith.constant dense<0.000000e+00> : vector<256x4xf32>
    %4 = tpu.matmul %2, %3, %cst {dimension_numbers = #tpu.dot_dimension_numbers<[1], [0], [0], [1], [0, 0, 1, 1], [], []>} : vector<256x16xbf16>, vector<16x4xbf16>, vector<256x4xf32> -> vector<256x4xf32>
    %c0_5 = arith.constant 0 : index
    %c0_6 = arith.constant 0 : index
    %5 = vector.load %arg3[%c0_5, %c0_6] : memref<1x4xf32, #tpu.memory_space<vmem>>, vector<1x4xf32>
    %6 = vector.broadcast %5 : vector<1x4xf32> to vector<256x4xf32>
    %7 = arith.addf %4, %6 : vector<256x4xf32>
    %cst_7 = arith.constant 0.000000e+00 : f32
    %8 = vector.broadcast %cst_7 : f32 to vector<256x4xf32>
    %9 = arith.maximumf %7, %8 : vector<256x4xf32>
    %10 = vector.shape_cast %9 : vector<256x4xf32> to vector<16x16x4xf32>
    %11 = tpu.iota {dimensions = array<i32: 1>} : vector<16x16x4xi32>
    %c1_i32 = arith.constant 1 : i32
    %12 = vector.broadcast %c1_i32 : i32 to vector<16x16x4xi32>
    %13 = arith.cmpi sge, %11, %12 : vector<16x16x4xi32>
    %c15_i32 = arith.constant 15 : i32
    %14 = vector.broadcast %c15_i32 : i32 to vector<16x16x4xi32>
    %15 = arith.cmpi slt, %11, %14 : vector<16x16x4xi32>
    %c1_i32_8 = arith.constant 1 : i32
    %16 = tpu.dynamic_rotate %10 by %c1_i32_8 dim 1 : vector<16x16x4xf32>, i32 -> vector<16x16x4xf32>
    %cst_9 = arith.constant 0.000000e+00 : f32
    %17 = vector.broadcast %cst_9 : f32 to vector<16x16x4xf32>
    %18 = arith.select %13, %16, %17 : vector<16x16x4xi1>, vector<16x16x4xf32>
    %c15_i32_10 = arith.constant 15 : i32
    %19 = tpu.dynamic_rotate %10 by %c15_i32_10 dim 1 : vector<16x16x4xf32>, i32 -> vector<16x16x4xf32>
    %cst_11 = arith.constant 0.000000e+00 : f32
    %20 = vector.broadcast %cst_11 : f32 to vector<16x16x4xf32>
    %21 = arith.select %15, %19, %20 : vector<16x16x4xi1>, vector<16x16x4xf32>
    %22 = arith.truncf %18 : vector<16x16x4xf32> to vector<16x16x4xbf16>
    %23 = arith.truncf %10 : vector<16x16x4xf32> to vector<16x16x4xbf16>
    %24 = arith.truncf %21 : vector<16x16x4xf32> to vector<16x16x4xbf16>
    %cst_12 = arith.constant 0.000000e+00 : bf16
    %25 = vector.broadcast %cst_12 : bf16 to vector<1x16x4xbf16>
    %26 = vector.extract_strided_slice %22 {offsets = [0, 0, 0], sizes = [15, 16, 4], strides = [1, 1, 1]} : vector<16x16x4xbf16> to vector<15x16x4xbf16>
    %27 = tpu.concatenate %25, %26 in 0 : vector<1x16x4xbf16>, vector<15x16x4xbf16> -> vector<16x16x4xbf16>
    %28 = vector.extract_strided_slice %23 {offsets = [0, 0, 0], sizes = [15, 16, 4], strides = [1, 1, 1]} : vector<16x16x4xbf16> to vector<15x16x4xbf16>
    %29 = tpu.concatenate %25, %28 in 0 : vector<1x16x4xbf16>, vector<15x16x4xbf16> -> vector<16x16x4xbf16>
    %30 = vector.extract_strided_slice %24 {offsets = [0, 0, 0], sizes = [15, 16, 4], strides = [1, 1, 1]} : vector<16x16x4xbf16> to vector<15x16x4xbf16>
    %31 = tpu.concatenate %25, %30 in 0 : vector<1x16x4xbf16>, vector<15x16x4xbf16> -> vector<16x16x4xbf16>
    %32 = vector.extract_strided_slice %22 {offsets = [1, 0, 0], sizes = [15, 16, 4], strides = [1, 1, 1]} : vector<16x16x4xbf16> to vector<15x16x4xbf16>
    %33 = tpu.concatenate %32, %25 in 0 : vector<15x16x4xbf16>, vector<1x16x4xbf16> -> vector<16x16x4xbf16>
    %34 = vector.extract_strided_slice %23 {offsets = [1, 0, 0], sizes = [15, 16, 4], strides = [1, 1, 1]} : vector<16x16x4xbf16> to vector<15x16x4xbf16>
    %35 = tpu.concatenate %34, %25 in 0 : vector<15x16x4xbf16>, vector<1x16x4xbf16> -> vector<16x16x4xbf16>
    %36 = vector.extract_strided_slice %24 {offsets = [1, 0, 0], sizes = [15, 16, 4], strides = [1, 1, 1]} : vector<16x16x4xbf16> to vector<15x16x4xbf16>
    %37 = tpu.concatenate %36, %25 in 0 : vector<15x16x4xbf16>, vector<1x16x4xbf16> -> vector<16x16x4xbf16>
    %38 = tpu.concatenate %27, %29, %31, %22, %23, %24, %33, %35, %37 in 2 : vector<16x16x4xbf16>, vector<16x16x4xbf16>, vector<16x16x4xbf16>, vector<16x16x4xbf16>, vector<16x16x4xbf16>, vector<16x16x4xbf16>, vector<16x16x4xbf16>, vector<16x16x4xbf16>, vector<16x16x4xbf16> -> vector<16x16x36xbf16>
    %39 = vector.shape_cast %38 : vector<16x16x36xbf16> to vector<256x36xbf16>
    %c0_13 = arith.constant 0 : index
    %c0_14 = arith.constant 0 : index
    %40 = vector.load %arg4[%c0_13, %c0_14] : memref<36x4xbf16, #tpu.memory_space<vmem>>, vector<36x4xbf16>
    %cst_15 = arith.constant dense<0.000000e+00> : vector<256x4xf32>
    %41 = tpu.matmul %39, %40, %cst_15 {dimension_numbers = #tpu.dot_dimension_numbers<[1], [0], [0], [1], [0, 0, 1, 1], [], []>} : vector<256x36xbf16>, vector<36x4xbf16>, vector<256x4xf32> -> vector<256x4xf32>
    %c0_16 = arith.constant 0 : index
    %c0_17 = arith.constant 0 : index
    %42 = vector.load %arg5[%c0_16, %c0_17] : memref<1x4xf32, #tpu.memory_space<vmem>>, vector<1x4xf32>
    %43 = vector.broadcast %42 : vector<1x4xf32> to vector<256x4xf32>
    %44 = arith.addf %41, %43 : vector<256x4xf32>
    %cst_18 = arith.constant 0.000000e+00 : f32
    %45 = vector.broadcast %cst_18 : f32 to vector<256x4xf32>
    %46 = arith.maximumf %44, %45 : vector<256x4xf32>
    %47 = arith.truncf %46 : vector<256x4xf32> to vector<256x4xbf16>
    %c0_19 = arith.constant 0 : index
    %c0_20 = arith.constant 0 : index
    %48 = vector.load %arg6[%c0_19, %c0_20] : memref<4x16xbf16, #tpu.memory_space<vmem>>, vector<4x16xbf16>
    %cst_21 = arith.constant dense<0.000000e+00> : vector<256x16xf32>
    %49 = tpu.matmul %47, %48, %cst_21 {dimension_numbers = #tpu.dot_dimension_numbers<[1], [0], [0], [1], [0, 0, 1, 1], [], []>} : vector<256x4xbf16>, vector<4x16xbf16>, vector<256x16xf32> -> vector<256x16xf32>
    %c0_22 = arith.constant 0 : index
    %c0_23 = arith.constant 0 : index
    %50 = vector.load %arg7[%c0_22, %c0_23] : memref<1x16xf32, #tpu.memory_space<vmem>>, vector<1x16xf32>
    %51 = vector.broadcast %50 : vector<1x16xf32> to vector<256x16xf32>
    %52 = arith.addf %49, %51 : vector<256x16xf32>
    %c0_24 = arith.constant 0 : index
    %c0_25 = arith.constant 0 : index
    %c0_26 = arith.constant 0 : index
    %c0_27 = arith.constant 0 : index
    %53 = vector.load %arg1[%c0_24, %c0_25, %c0_26, %c0_27] : memref<1x16x16x16xbf16, #tpu.memory_space<vmem>>, vector<1x16x16x16xbf16>
    %54 = vector.shape_cast %53 : vector<1x16x16x16xbf16> to vector<16x16x16xbf16>
    %55 = vector.shape_cast %54 : vector<16x16x16xbf16> to vector<256x16xbf16>
    %56 = arith.extf %55 : vector<256x16xbf16> to vector<256x16xf32>
    %57 = arith.addf %52, %56 : vector<256x16xf32>
    %cst_28 = arith.constant 0.000000e+00 : f32
    %58 = vector.broadcast %cst_28 : f32 to vector<256x16xf32>
    %59 = arith.maximumf %57, %58 : vector<256x16xf32>
    %60 = vector.shape_cast %59 : vector<256x16xf32> to vector<16x16x16xf32>
    %c0_29 = arith.constant 0 : index
    %c0_30 = arith.constant 0 : index
    %c0_31 = arith.constant 0 : index
    %c0_32 = arith.constant 0 : index
    %61 = vector.load %arg8[%c0_29, %c0_30, %c0_31, %c0_32] : memref<1x16x16x16xf32, #tpu.memory_space<vmem>>, vector<1x16x16x16xf32>
    %62 = vector.shape_cast %61 : vector<1x16x16x16xf32> to vector<16x16x16xf32>
    %63 = vector.shape_cast %60 : vector<16x16x16xf32> to vector<1x16x16x16xf32>
    tpu.vector_store %arg8[%c0_29, %c0_30, %c0_31, %c0_32], %63 {strides = array<i32>} : memref<1x16x16x16xf32, #tpu.memory_space<vmem>>, vector<1x16x16x16xf32>,
    return
  }
  func.func @transform_0(%arg0: i32) -> (i32, i32, i32, i32) {
    %c0_i32 = arith.constant 0 : i32
    %c0_i32_0 = arith.constant 0 : i32
    %c0_i32_1 = arith.constant 0 : i32
    %c0_i32_2 = arith.constant 0 : i32
    return %arg0, %c0_i32, %c0_i32_0, %c0_i32_1 : i32, i32, i32, i32
  }
  func.func @transform_1(%arg0: i32) -> (i32, i32) {
    %c0_i32 = arith.constant 0 : i32
    %c0_i32_0 = arith.constant 0 : i32
    %c0_i32_1 = arith.constant 0 : i32
    return %c0_i32, %c0_i32_0 : i32, i32
  }
  func.func @transform_2(%arg0: i32) -> (i32, i32) {
    %c0_i32 = arith.constant 0 : i32
    %c0_i32_0 = arith.constant 0 : i32
    %c0_i32_1 = arith.constant 0 : i32
    return %c0_i32, %c0_i32_0 : i32, i32
  }
  func.func @transform_3(%arg0: i32) -> (i32, i32) {
    %c0_i32 = arith.constant 0 : i32
    %c0_i32_0 = arith.constant 0 : i32
    %c0_i32_1 = arith.constant 0 : i32
    return %c0_i32, %c0_i32_0 : i32, i32
  }
  func.func @transform_4(%arg0: i32) -> (i32, i32) {
    %c0_i32 = arith.constant 0 : i32
    %c0_i32_0 = arith.constant 0 : i32
    %c0_i32_1 = arith.constant 0 : i32
    return %c0_i32, %c0_i32_0 : i32, i32
  }
  func.func @transform_5(%arg0: i32) -> (i32, i32) {
    %c0_i32 = arith.constant 0 : i32
    %c0_i32_0 = arith.constant 0 : i32
    %c0_i32_1 = arith.constant 0 : i32
    return %c0_i32, %c0_i32_0 : i32, i32
  }
  func.func @transform_6(%arg0: i32) -> (i32, i32) {
    %c0_i32 = arith.constant 0 : i32
    %c0_i32_0 = arith.constant 0 : i32
    %c0_i32_1 = arith.constant 0 : i32
    return %c0_i32, %c0_i32_0 : i32, i32
  }
  func.func @transform_7(%arg0: i32) -> (i32, i32, i32, i32) {
    %c0_i32 = arith.constant 0 : i32
    %c0_i32_0 = arith.constant 0 : i32
    %c0_i32_1 = arith.constant 0 : i32
    %c0_i32_2 = arith.constant 0 : i32
    return %arg0, %c0_i32, %c0_i32_0, %c0_i32_1 : i32, i32, i32, i32
  }
}

</mosaic_0001>

<llo_original>
// kernel: tpu_custom_call.1
$region0: #{tpu_custom_call.1}
  #allocation0 [shape = 'u32[]', space=smem, size = 0x4, offset = 0x4, fixed_abs, tag = 'smem constant byte address 0x4 - core index']
  #allocation1 [shape = 'u32[72,128]{1,0:T(1,128)}', space=vmem, size = 0x9000, scoped, tag = 'internal scratch']
  %s0 = inlined_call_operand.hbm [shape: bf16[2,16,16,16], index: 0, kind: input, shape index: {}]
  %s1 = inlined_call_operand.vmem [shape: bf16[16,4], index: 1, kind: input, shape index: {}]
  %s2 = inlined_call_operand.vmem [shape: f32[1,4], index: 2, kind: input, shape index: {}]
  %s3 = inlined_call_operand.vmem [shape: bf16[36,4], index: 3, kind: input, shape index: {}]
  %s4 = inlined_call_operand.vmem [shape: f32[1,4], index: 4, kind: input, shape index: {}]
  %s5 = inlined_call_operand.vmem [shape: bf16[4,16], index: 5, kind: input, shape index: {}]
  %s6 = inlined_call_operand.vmem [shape: f32[1,16], index: 6, kind: input, shape index: {}]
  %s7 = inlined_call_operand.hbm [shape: f32[2,16,16,16], index: 7, kind: output, shape index: {}]
  %s8 = sld [smem:[#allocation0]]
  $region65: #{tpu_custom_call.1} parent=0
    _
  %s10 = ssub.s32 1, %s8
  %s11 = scalar_select 0, %s10, %s8
  $region1: #{tpu_custom_call.1} parent=0
    #allocation2 [shape = 'u8[131072]{0}', space=vmem, size = 0x20000, scoped, tag = 'input window, operand 0']
    #allocation3 [shape = 's32[2]{0}', space=sflag, size = 0x8, scoped, tag = 'scoped memory for tpu_custom_call.1']
    #allocation4 [shape = 's32[2]{0}', space=sflag, size = 0x8, scoped, tag = 'scoped memory for tpu_custom_call.1']
    #allocation5 [shape = 'u8[262144]{0}', space=vmem, size = 0x40000, scoped, tag = 'output window, operand 0']
    %12 = vsyncpa [#allocation3], 0
    %s13 = scalar_lea.sflag [#allocation3], 1
    %14 = vsyncpa %s13, 0
    %15 = vsyncpa [#allocation4], 0
    %s16 = scalar_lea.sflag [#allocation4], 1
    %17 = vsyncpa %s16, 0
    loop: start=0, step=1, limit=4
    $region2: #{tpu_custom_call.1} parent=1 // loop_pre_header
      _
    $region3: #{tpu_custom_call.1} parent=1 // loop_header
      %s19 = sphi 0, %s23
      %p20 = scmp.ge.s32.totalorder %s19, 4
      %s29 = sphi 0, %s31
      %s32 = sphi 0, %s29
      %s33 = sphi 0, %s32
      %s49 = sphi 0, %s33
      %s53 = sphi 0, %s53
      %s55 = sphi 0, %s53
      %s56 = sphi 0, %s55
      %s70 = sphi 0, %s56
      %s74 = sphi 0, %s74
      %s76 = sphi 0, %s74
      %s77 = sphi 0, %s76
      %s91 = sphi 0, %s77
      %s95 = sphi 0, %s95
      %s97 = sphi 0, %s95
      %s98 = sphi 0, %s97
      %s112 = sphi 0, %s98
      %s116 = sphi 0, %s116
      %s118 = sphi 0, %s116
      %s119 = sphi 0, %s118
      %s133 = sphi 0, %s119
      %s137 = sphi 0, %s137
      %s139 = sphi 0, %s137
      %s140 = sphi 0, %s139
      %s154 = sphi 0, %s140
      %s158 = sphi 0, %s158
      %s160 = sphi 0, %s158
      %s161 = sphi 0, %s160
      %s175 = sphi 0, %s161
      %s181 = sphi 0, %s183
      %s184 = sphi 0, %s181
      %s185 = sphi 0, %s184
      %s201 = sphi 0, %s185
    $region4: #{tpu_custom_call.1} parent=1 // loop_header_branch
      %22 = sbr.rel (%p20) target = $region8
    $region5: #{tpu_custom_call.1} parent=1 // loop_body
      %s24 = ssub.s32 %s19, 1
      %s25 = ssub.s32 %s19, 2
      %s26 = sadd.s32 %s19, 1
      %s27 = ssub.s32 %s19, %s26
      %p28 = scmp.eq.s32.totalorder %s27, 0
      %s30 = sadd.s32 %s29, 1
      %s31 = scalar_select %p28, %s29, %s30
      %p34 = pneg %p28
      %p35 = scmp.eq.s32.totalorder %s19, 1
      %p36 = por %p34, %p35
      %p37 = scmp.ne.s32.totalorder %s29, %s32
      %p38 = scmp.eq.s32.totalorder %s19, 0
      %p39 = por %p37, %p38
      %p40 = scmp.ne.s32.totalorder %s29, %s32
      %p41 = scmp.eq.s32.totalorder %s24, 1
      %p42 = por %p40, %p41
      %p43 = scmp.ne.s32.totalorder %s32, %s33
      %p44 = scmp.eq.s32.totalorder %s24, 0
      %p45 = por %p43, %p44
      %p46 = scmp.ne.s32.totalorder %s32, %s33
      %p47 = scmp.eq.s32.totalorder %s25, 1
      %p48 = por %p46, %p47
      %p50 = scmp.ne.s32.totalorder %s33, %s49
      %p51 = scmp.eq.s32.totalorder %s25, 0
      %p52 = por %p50, %p51
      %s54 = sadd.s32 %s53, 1
      %p57 = scmp.eq.s32.totalorder %s19, 1
      %p58 = scmp.ne.s32.totalorder %s53, %s55
      %p59 = scmp.eq.s32.totalorder %s19, 0
      %p60 = por %p58, %p59
      %p61 = scmp.ne.s32.totalorder %s53, %s55
      %p62 = scmp.eq.s32.totalorder %s24, 1
      %p63 = por %p61, %p62
      %p64 = scmp.ne.s32.totalorder %s55, %s56
      %p65 = scmp.eq.s32.totalorder %s24, 0
      %p66 = por %p64, %p65
      %p67 = scmp.ne.s32.totalorder %s55, %s56
      %p68 = scmp.eq.s32.totalorder %s25, 1
      %p69 = por %p67, %p68
      %p71 = scmp.ne.s32.totalorder %s56, %s70
      %p72 = scmp.eq.s32.totalorder %s25, 0
      %p73 = por %p71, %p72
      %s75 = sadd.s32 %s74, 1
      %p78 = scmp.eq.s32.totalorder %s19, 1
      %p79 = scmp.ne.s32.totalorder %s74, %s76
      %p80 = scmp.eq.s32.totalorder %s19, 0
      %p81 = por %p79, %p80
      %p82 = scmp.ne.s32.totalorder %s74, %s76
      %p83 = scmp.eq.s32.totalorder %s24, 1
      %p84 = por %p82, %p83
      %p85 = scmp.ne.s32.totalorder %s76, %s77
      %p86 = scmp.eq.s32.totalorder %s24, 0
      %p87 = por %p85, %p86
      %p88 = scmp.ne.s32.totalorder %s76, %s77
      %p89 = scmp.eq.s32.totalorder %s25, 1
      %p90 = por %p88, %p89
      %p92 = scmp.ne.s32.totalorder %s77, %s91
      %p93 = scmp.eq.s32.totalorder %s25, 0
      %p94 = por %p92, %p93
      %s96 = sadd.s32 %s95, 1
      %p99 = scmp.eq.s32.totalorder %s19, 1
      %p100 = scmp.ne.s32.totalorder %s95, %s97
      %p101 = scmp.eq.s32.totalorder %s19, 0
      %p102 = por %p100, %p101
      %p103 = scmp.ne.s32.totalorder %s95, %s97
      %p104 = scmp.eq.s32.totalorder %s24, 1
      %p105 = por %p103, %p104
      %p106 = scmp.ne.s32.totalorder %s97, %s98
      %p107 = scmp.eq.s32.totalorder %s24, 0
      %p108 = por %p106, %p107
      %p109 = scmp.ne.s32.totalorder %s97, %s98
      %p110 = scmp.eq.s32.totalorder %s25, 1
      %p111 = por %p109, %p110
      %p113 = scmp.ne.s32.totalorder %s98, %s112
      %p114 = scmp.eq.s32.totalorder %s25, 0
      %p115 = por %p113, %p114
      %s117 = sadd.s32 %s116, 1
      %p120 = scmp.eq.s32.totalorder %s19, 1
      %p121 = scmp.ne.s32.totalorder %s116, %s118
      %p122 = scmp.eq.s32.totalorder %s19, 0
      %p123 = por %p121, %p122
      %p124 = scmp.ne.s32.totalorder %s116, %s118
      %p125 = scmp.eq.s32.totalorder %s24, 1
      %p126 = por %p124, %p125
      %p127 = scmp.ne.s32.totalorder %s118, %s119
      %p128 = scmp.eq.s32.totalorder %s24, 0
      %p129 = por %p127, %p128
      %p130 = scmp.ne.s32.totalorder %s118, %s119
      %p131 = scmp.eq.s32.totalorder %s25, 1
      %p132 = por %p130, %p131
      %p134 = scmp.ne.s32.totalorder %s119, %s133
      %p135 = scmp.eq.s32.totalorder %s25, 0
      %p136 = por %p134, %p135
      %s138 = sadd.s32 %s137, 1
      %p141 = scmp.eq.s32.totalorder %s19, 1
      %p142 = scmp.ne.s32.totalorder %s137, %s139
      %p143 = scmp.eq.s32.totalorder %s19, 0
      %p144 = por %p142, %p143
      %p145 = scmp.ne.s32.totalorder %s137, %s139
      %p146 = scmp.eq.s32.totalorder %s24, 1
      %p147 = por %p145, %p146
      %p148 = scmp.ne.s32.totalorder %s139, %s140
      %p149 = scmp.eq.s32.totalorder %s24, 0
      %p150 = por %p148, %p149
      %p151 = scmp.ne.s32.totalorder %s139, %s140
      %p152 = scmp.eq.s32.totalorder %s25, 1
      %p153 = por %p151, %p152
      %p155 = scmp.ne.s32.totalorder %s140, %s154
      %p156 = scmp.eq.s32.totalorder %s25, 0
      %p157 = por %p155, %p156
      %s159 = sadd.s32 %s158, 1
      %p162 = scmp.eq.s32.totalorder %s19, 1
      %p163 = scmp.ne.s32.totalorder %s158, %s160
      %p164 = scmp.eq.s32.totalorder %s19, 0
      %p165 = por %p163, %p164
      %p166 = scmp.ne.s32.totalorder %s158, %s160
      %p167 = scmp.eq.s32.totalorder %s24, 1
      %p168 = por %p166, %p167
      %p169 = scmp.ne.s32.totalorder %s160, %s161
      %p170 = scmp.eq.s32.totalorder %s24, 0
      %p171 = por %p169, %p170
      %p172 = scmp.ne.s32.totalorder %s160, %s161
      %p173 = scmp.eq.s32.totalorder %s25, 1
      %p174 = por %p172, %p173
      %p176 = scmp.ne.s32.totalorder %s161, %s175
      %p177 = scmp.eq.s32.totalorder %s25, 0
      %p178 = por %p176, %p177
      %s179 = ssub.s32 %s19, %s26
      %p180 = scmp.eq.s32.totalorder %s179, 0
      %s182 = sadd.s32 %s181, 1
      %s183 = scalar_select %p180, %s181, %s182
      %p186 = pneg %p180
      %p187 = scmp.eq.s32.totalorder %s19, 1
      %p188 = por %p186, %p187
      %p189 = scmp.ne.s32.totalorder %s181, %s184
      %p190 = scmp.eq.s32.totalorder %s19, 0
      %p191 = por %p189, %p190
      %p192 = scmp.ne.s32.totalorder %s181, %s184
      %p193 = scmp.eq.s32.totalorder %s24, 1
      %p194 = por %p192, %p193
      %p195 = scmp.ne.s32.totalorder %s184, %s185
      %p196 = scmp.eq.s32.totalorder %s24, 0
      %p197 = por %p195, %p196
      %p198 = scmp.ne.s32.totalorder %s184, %s185
      %p199 = scmp.eq.s32.totalorder %s25, 1
      %p200 = por %p198, %p199
      %p202 = scmp.ne.s32.totalorder %s185, %s201
      %p203 = scmp.eq.s32.totalorder %s25, 0
      %p204 = por %p202, %p203
      %p205 = scmp.le.s32.totalorder 1, %s19
      %p206 = scmp.lt.s32.totalorder %s19, 3
      %p207 = pnand %p205, %p206
      %p208 = pneg %p207
      // Predicated region
      $region9: #{tpu_custom_call.1} parent=5 // pred_check
        _
      $region10: #{tpu_custom_call.1} parent=5 // pred_check_branch
        %210 = sbr.rel (%p207) target = $region12
      $region11: #{tpu_custom_call.1} parent=5 // pred_region
        %s211 = ssub.s32 %s19, 1
        // Predicated region
        $region13: #{tpu_custom_call.1} parent=11 // pred_check
          %p212 = pneg %p66
        $region14: #{tpu_custom_call.1} parent=11 // pred_check_branch
          %214 = sbr.rel (%p212) target = $region16
        $region15: #{tpu_custom_call.1} parent=11 // pred_region
          _
        $region16: #{tpu_custom_call.1} parent=11 // pred_fallthru
          _
        // Predicated region
        $region17: #{tpu_custom_call.1} parent=11 // pred_check
          %p215 = pneg %p87
        $region18: #{tpu_custom_call.1} parent=11 // pred_check_branch
          %217 = sbr.rel (%p215) target = $region20
        $region19: #{tpu_custom_call.1} parent=11 // pred_region
          _
        $region20: #{tpu_custom_call.1} parent=11 // pred_fallthru
          _
        // Predicated region
        $region21: #{tpu_custom_call.1} parent=11 // pred_check
          %p218 = pneg %p108
        $region22: #{tpu_custom_call.1} parent=11 // pred_check_branch
          %220 = sbr.rel (%p218) target = $region24
        $region23: #{tpu_custom_call.1} parent=11 // pred_region
          _
        $region24: #{tpu_custom_call.1} parent=11 // pred_fallthru
          _
        // Predicated region
        $region25: #{tpu_custom_call.1} parent=11 // pred_check
          %p221 = pneg %p129
        $region26: #{tpu_custom_call.1} parent=11 // pred_check_branch
          %223 = sbr.rel (%p221) target = $region28
        $region27: #{tpu_custom_call.1} parent=11 // pred_region
          _
        $region28: #{tpu_custom_call.1} parent=11 // pred_fallthru
          _
        // Predicated region
        $region29: #{tpu_custom_call.1} parent=11 // pred_check
          %p224 = pneg %p150
        $region30: #{tpu_custom_call.1} parent=11 // pred_check_branch
          %226 = sbr.rel (%p224) target = $region32
        $region31: #{tpu_custom_call.1} parent=11 // pred_region
          _
        $region32: #{tpu_custom_call.1} parent=11 // pred_fallthru
          _
        // Predicated region
        $region33: #{tpu_custom_call.1} parent=11 // pred_check
          %p227 = pneg %p171
        $region34: #{tpu_custom_call.1} parent=11 // pred_check_branch
          %229 = sbr.rel (%p227) target = $region36
        $region35: #{tpu_custom_call.1} parent=11 // pred_region
          _
        $region36: #{tpu_custom_call.1} parent=11 // pred_fallthru
          _
      $region12: #{tpu_custom_call.1} parent=5 // pred_fallthru
        _
      %p230 = scmp.lt.s32.totalorder %s19, 2
      // Predicated region
      $region37: #{tpu_custom_call.1} parent=5 // pred_check
        %p231 = pneg %p230
      $region38: #{tpu_custom_call.1} parent=5 // pred_check_branch
        %233 = sbr.rel (%p231) target = $region40
      $region39: #{tpu_custom_call.1} parent=5 // pred_region
        // Predicated region
        $region41: #{tpu_custom_call.1} parent=39 // pred_check
          %p234 = pneg %p39
        $region42: #{tpu_custom_call.1} parent=39 // pred_check_branch
          %236 = sbr.rel (%p234) target = $region44
        $region43: #{tpu_custom_call.1} parent=39 // pred_region
          %s237 = sand.u32 %s29, 1
          %s238 = scalar_lea.sflag [#allocation3], %s237
          %s239 = sand.u32 %s29, 1
          %s240 = smul.addr %s239, 128
          %s241 = scalar_lea.vmem [#allocation2], %s240
          %243 = vsyncadd %s238, 0
          %s244 = smul.addr %s19, 32
          %s245 = smul.addr %s244, 4
          %s246 = scalar_lea.hbm %s0, %s245
          %s247 = sshll.u32 %s246, 4
          %s248 = int_to_ptr.hbm [resolvable:$true] %s247
          %s249 = sshll.u32 %s241, 4
          %s250 = int_to_ptr.vmem [resolvable:$true] %s249
          %255 = dma.hbm_to_vmem [thread:$0]  %s248, 2048, %s250, %s238, 64, 64, 4
        $region44: #{tpu_custom_call.1} parent=39 // pred_fallthru
          _
      $region40: #{tpu_custom_call.1} parent=5 // pred_fallthru
        _
      %p256 = scmp.le.s32.totalorder 1, %s19
      %p257 = scmp.lt.s32.totalorder %s19, 3
      %p258 = pnand %p256, %p257
      %p259 = pneg %p258
      // Predicated region
      $region45: #{tpu_custom_call.1} parent=5 // pred_check
        _
      $region46: #{tpu_custom_call.1} parent=5 // pred_check_branch
        %261 = sbr.rel (%p258) target = $region48
      $region47: #{tpu_custom_call.1} parent=5 // pred_region
        %s262 = ssub.s32 %s19, 1
        %s263 = sand.u32 %s32, 1
        %s264 = scalar_lea.sflag [#allocation3], %s263
        %s265 = sand.u32 %s32, 1
        %s266 = smul.addr %s265, 128
        %s267 = scalar_lea.vmem [#allocation2], %s266
        // Predicated region
        $region49: #{tpu_custom_call.1} parent=47 // pred_check
          %p268 = pneg %p45
        $region50: #{tpu_custom_call.1} parent=47 // pred_check_branch
          %270 = sbr.rel (%p268) target = $region52
        $region51: #{tpu_custom_call.1} parent=47 // pred_region
          %272 = dma.done %s264, 2048
        $region52: #{tpu_custom_call.1} parent=47 // pred_fallthru
          _
        %s273 = sand.u32 %s32, 1
        %s274 = scalar_lea.sflag [#allocation3], %s273
        %s275 = sand.u32 %s32, 1
        %s276 = smul.addr %s275, 128
        %s277 = scalar_lea.vmem [#allocation2], %s276
        %p278 = pneg %p45
        %p279 = pneg %p42
        %p280 = pneg %p66
        %p281 = pneg %p63
        %p282 = pneg %p87
        %p283 = pneg %p84
        %p284 = pneg %p108
        %p285 = pneg %p105
        %p286 = pneg %p129
        %p287 = pneg %p126
        %p288 = pneg %p150
        %p289 = pneg %p147
        %p290 = pneg %p171
        %p291 = pneg %p168
        %p292 = pneg %p197
        %p293 = pneg %p194
        %s294 = sand.u32 %s184, 1
        %s295 = scalar_lea.sflag [#allocation4], %s294
        %s296 = sand.u32 %s184, 1
        %s297 = smul.addr %s296, 256
        %s298 = scalar_lea.vmem [#allocation5], %s297
        %v300 = vld [vmem:[%s267] sm:$0xf]
        %v301 = vld [vmem:[%s267 + $0x4] sm:$0xf]
        %v302 = vld [vmem:[%s267 + $0x8] sm:$0xf]
        %v303 = vld [vmem:[%s267 + $0xc] sm:$0xf]
        %v304 = vld [vmem:[%s267 + $0x10] sm:$0xf]
        %v305 = vld [vmem:[%s267 + $0x14] sm:$0xf]
        %v306 = vld [vmem:[%s267 + $0x18] sm:$0xf]
        %v307 = vld [vmem:[%s267 + $0x1c] sm:$0xf]
        %v308 = vld [vmem:[%s267 + $0x20] sm:$0xf]
        %v309 = vld [vmem:[%s267 + $0x24] sm:$0xf]
        %v310 = vld [vmem:[%s267 + $0x28] sm:$0xf]
        %v311 = vld [vmem:[%s267 + $0x2c] sm:$0xf]
        %v312 = vld [vmem:[%s267 + $0x30] sm:$0xf]
        %v313 = vld [vmem:[%s267 + $0x34] sm:$0xf]
        %v314 = vld [vmem:[%s267 + $0x38] sm:$0xf]
        %v315 = vld [vmem:[%s267 + $0x3c] sm:$0xf]
        %v316 = vld [vmem:[%s267 + $0x40] sm:$0xf]
        %v317 = vld [vmem:[%s267 + $0x44] sm:$0xf]
        %v318 = vld [vmem:[%s267 + $0x48] sm:$0xf]
        %v319 = vld [vmem:[%s267 + $0x4c] sm:$0xf]
        %v320 = vld [vmem:[%s267 + $0x50] sm:$0xf]
        %v321 = vld [vmem:[%s267 + $0x54] sm:$0xf]
        %v322 = vld [vmem:[%s267 + $0x58] sm:$0xf]
        %v323 = vld [vmem:[%s267 + $0x5c] sm:$0xf]
        %v324 = vld [vmem:[%s267 + $0x60] sm:$0xf]
        %v325 = vld [vmem:[%s267 + $0x64] sm:$0xf]
        %v326 = vld [vmem:[%s267 + $0x68] sm:$0xf]
        %v327 = vld [vmem:[%s267 + $0x6c] sm:$0xf]
        %v328 = vld [vmem:[%s267 + $0x70] sm:$0xf]
        %v329 = vld [vmem:[%s267 + $0x74] sm:$0xf]
        %v330 = vld [vmem:[%s267 + $0x78] sm:$0xf]
        %v331 = vld [vmem:[%s267 + $0x7c] sm:$0xf]
        %v332 = vld [vmem:[%s1] sm:$0xf]
        %v333 = vld [vmem:[%s1 + $0x4] sm:$0xf]
        %v334 = vld [vmem:[%s2] sm:$0x1]
        %v336 = vperm.slane %v334, 0
        %v370 = vunpack.c.l.b16 %v300
        %v371 = vunpack.c.l.b16 %v301
        %v372 = vunpack.c.l.b16 %v302
        %v373 = vunpack.c.l.b16 %v303
        %v374 = vunpack.c.l.b16 %v304
        %v375 = vunpack.c.l.b16 %v305
        %v376 = vunpack.c.l.b16 %v306
        %v377 = vunpack.c.l.b16 %v307
        %v378 = vunpack.c.l.b16 %v308
        %v379 = vunpack.c.l.b16 %v309
        %v380 = vunpack.c.l.b16 %v310
        %v381 = vunpack.c.l.b16 %v311
        %v382 = vunpack.c.l.b16 %v312
        %v383 = vunpack.c.l.b16 %v313
        %v384 = vunpack.c.l.b16 %v314
        %v385 = vunpack.c.l.b16 %v315
        %v386 = vunpack.c.l.b16 %v316
        %v387 = vunpack.c.l.b16 %v317
        %v388 = vunpack.c.l.b16 %v318
        %v389 = vunpack.c.l.b16 %v319
        %v390 = vunpack.c.l.b16 %v320
        %v391 = vunpack.c.l.b16 %v321
        %v392 = vunpack.c.l.b16 %v322
        %v393 = vunpack.c.l.b16 %v323
        %v394 = vunpack.c.l.b16 %v324
        %v395 = vunpack.c.l.b16 %v325
        %v396 = vunpack.c.l.b16 %v326
        %v397 = vunpack.c.l.b16 %v327
        %v398 = vunpack.c.l.b16 %v328
        %v399 = vunpack.c.l.b16 %v329
        %v400 = vunpack.c.l.b16 %v330
        %v401 = vunpack.c.l.b16 %v331
        %v402 = vpack.c.b16 %v371, %v370
        %v403 = vpack.c.b16 %v373, %v372
        %v404 = vpack.c.b16 %v375, %v374
        %v405 = vpack.c.b16 %v377, %v376
        %v406 = vpack.c.b16 %v379, %v378
        %v407 = vpack.c.b16 %v381, %v380
        %v408 = vpack.c.b16 %v383, %v382
        %v409 = vpack.c.b16 %v385, %v384
        %v410 = vpack.c.b16 %v387, %v386
        %v411 = vpack.c.b16 %v389, %v388
        %v412 = vpack.c.b16 %v391, %v390
        %v413 = vpack.c.b16 %v393, %v392
        %v414 = vpack.c.b16 %v395, %v394
        %v415 = vpack.c.b16 %v397, %v396
        %v416 = vpack.c.b16 %v399, %v398
        %v417 = vpack.c.b16 %v401, %v400
        %v420 = vunpack.c.l.b16 %v332
        %v421 = vunpack.c.l.b16 %v333
        %v422 = vpack.c.b16 %v421, %v420
        %vm424 = vcmask 130048
        %v426 = vsel %vm424, %v402, 0
        %v429 = vsel %vm424, %v403, 0
        %v432 = vsel %vm424, %v404, 0
        %v435 = vsel %vm424, %v405, 0
        %v438 = vsel %vm424, %v406, 0
        %v441 = vsel %vm424, %v407, 0
        %v444 = vsel %vm424, %v408, 0
        %v447 = vsel %vm424, %v409, 0
        %v450 = vsel %vm424, %v410, 0
        %v453 = vsel %vm424, %v411, 0
        %v456 = vsel %vm424, %v412, 0
        %v459 = vsel %vm424, %v413, 0
        %v462 = vsel %vm424, %v414, 0
        %v465 = vsel %vm424, %v415, 0
        %v468 = vsel %vm424, %v416, 0
        %v471 = vsel %vm424, %v417, 0
        %473 = vmatpush.bf16.msra.mxu0 0
        %474 = vmatpush.bf16.msra.mxu0 0
        %475 = vmatpush.bf16.msra.mxu0 0
        %476 = vmatpush.bf16.msra.mxu0 0
        %477 = vmatpush.bf16.msra.mxu0 0
        %478 = vmatpush.bf16.msra.mxu0 0
        %479 = vmatpush.bf16.msra.mxu0 0
        %480 = vmatpush.bf16.msra.mxu0 %v422
        %481 = vmatmul.bf16.gmra.mxu0 %v426
        %v482 = vpop.f32.mrf.mxu0
        %v483 = vadd.f32 %v336, %v482
        %v484 = vpop.f32.mrf.mxu0
        %v485 = vadd.f32 %v336, %v484
        %486 = vmatmul.bf16.gmra.mxu0 %v429
        %v487 = vpop.f32.mrf.mxu0
        %v488 = vadd.f32 %v336, %v487
        %v489 = vpop.f32.mrf.mxu0
        %v490 = vadd.f32 %v336, %v489
        %491 = vmatmul.bf16.gmra.mxu0 %v432
        %v492 = vpop.f32.mrf.mxu0
        %v493 = vadd.f32 %v336, %v492
        %v494 = vpop.f32.mrf.mxu0
        %v495 = vadd.f32 %v336, %v494
        %496 = vmatmul.bf16.gmra.mxu0 %v435
        %v497 = vpop.f32.mrf.mxu0
        %v498 = vadd.f32 %v336, %v497
        %v499 = vpop.f32.mrf.mxu0
        %v500 = vadd.f32 %v336, %v499
        %501 = vmatmul.bf16.gmra.mxu0 %v438
        %v502 = vpop.f32.mrf.mxu0
        %v503 = vadd.f32 %v336, %v502
        %v504 = vpop.f32.mrf.mxu0
        %v505 = vadd.f32 %v336, %v504
        %506 = vmatmul.bf16.gmra.mxu0 %v441
        %v507 = vpop.f32.mrf.mxu0
        %v508 = vadd.f32 %v336, %v507
        %v509 = vpop.f32.mrf.mxu0
        %v510 = vadd.f32 %v336, %v509
        %511 = vmatmul.bf16.gmra.mxu0 %v444
        %v512 = vpop.f32.mrf.mxu0
        %v513 = vadd.f32 %v336, %v512
        %v514 = vpop.f32.mrf.mxu0
        %v515 = vadd.f32 %v336, %v514
        %516 = vmatmul.bf16.gmra.mxu0 %v447
        %v517 = vpop.f32.mrf.mxu0
        %v518 = vadd.f32 %v336, %v517
        %v519 = vpop.f32.mrf.mxu0
        %v520 = vadd.f32 %v336, %v519
        %521 = vmatmul.bf16.gmra.mxu0 %v450
        %v522 = vpop.f32.mrf.mxu0
        %v523 = vadd.f32 %v336, %v522
        %v524 = vpop.f32.mrf.mxu0
        %v525 = vadd.f32 %v336, %v524
        %526 = vmatmul.bf16.gmra.mxu0 %v453
        %v527 = vpop.f32.mrf.mxu0
        %v528 = vadd.f32 %v336, %v527
        %v529 = vpop.f32.mrf.mxu0
        %v530 = vadd.f32 %v336, %v529
        %531 = vmatmul.bf16.gmra.mxu0 %v456
        %v532 = vpop.f32.mrf.mxu0
        %v533 = vadd.f32 %v336, %v532
        %v534 = vpop.f32.mrf.mxu0
        %v535 = vadd.f32 %v336, %v534
        %536 = vmatmul.bf16.gmra.mxu0 %v459
        %v537 = vpop.f32.mrf.mxu0
        %v538 = vadd.f32 %v336, %v537
        %v539 = vpop.f32.mrf.mxu0
        %v540 = vadd.f32 %v336, %v539
        %541 = vmatmul.bf16.gmra.mxu0 %v462
        %v542 = vpop.f32.mrf.mxu0
        %v543 = vadd.f32 %v336, %v542
        %v544 = vpop.f32.mrf.mxu0
        %v545 = vadd.f32 %v336, %v544
        %546 = vmatmul.bf16.gmra.mxu0 %v465
        %v547 = vpop.f32.mrf.mxu0
        %v548 = vadd.f32 %v336, %v547
        %v549 = vpop.f32.mrf.mxu0
        %v550 = vadd.f32 %v336, %v549
        %551 = vmatmul.bf16.gmra.mxu0 %v468
        %v552 = vpop.f32.mrf.mxu0
        %v553 = vadd.f32 %v336, %v552
        %v554 = vpop.f32.mrf.mxu0
        %v555 = vadd.f32 %v336, %v554
        %556 = vmatmul.bf16.gmra.mxu0 %v471
        %v557 = vpop.f32.mrf.mxu0
        %v558 = vadd.f32 %v336, %v557
        %v559 = vpop.f32.mrf.mxu0
        %v560 = vadd.f32 %v336, %v559
        %561 = vdwg.mxu0
        %v562 = vmax.f32 %v483, 0.0
        %v563 = vmax.f32 %v485, 0.0
        %v564 = vmax.f32 %v488, 0.0
        %v565 = vmax.f32 %v490, 0.0
        %v566 = vmax.f32 %v493, 0.0
        %v567 = vmax.f32 %v495, 0.0
        %v568 = vmax.f32 %v498, 0.0
        %v569 = vmax.f32 %v500, 0.0
        %v570 = vmax.f32 %v503, 0.0
        %v571 = vmax.f32 %v505, 0.0
        %v572 = vmax.f32 %v508, 0.0
        %v573 = vmax.f32 %v510, 0.0
        %v574 = vmax.f32 %v513, 0.0
        %v575 = vmax.f32 %v515, 0.0
        %v576 = vmax.f32 %v518, 0.0
        %v577 = vmax.f32 %v520, 0.0
        %v578 = vmax.f32 %v523, 0.0
        %v579 = vmax.f32 %v525, 0.0
        %v580 = vmax.f32 %v528, 0.0
        %v581 = vmax.f32 %v530, 0.0
        %v582 = vmax.f32 %v533, 0.0
        %v583 = vmax.f32 %v535, 0.0
        %v584 = vmax.f32 %v538, 0.0
        %v585 = vmax.f32 %v540, 0.0
        %v586 = vmax.f32 %v543, 0.0
        %v587 = vmax.f32 %v545, 0.0
        %v588 = vmax.f32 %v548, 0.0
        %v589 = vmax.f32 %v550, 0.0
        %v590 = vmax.f32 %v553, 0.0
        %v591 = vmax.f32 %v555, 0.0
        %v592 = vmax.f32 %v558, 0.0
        %v593 = vmax.f32 %v560, 0.0
        %v594 = vlaneseq
        %v595 = vshrl.u32 %v594, 7
        %v596 = vadd.s32 %v595, 8
        %vm597 = vcmp.ge.s32.totalorder %v595, 1
        %vm598 = vcmp.ge.s32.totalorder %v596, 1
        %vm599 = vcmp.lt.s32.totalorder %v595, 15
        %vm600 = vcmp.lt.s32.totalorder %v596, 15
        %v601 = vrot.slane %v562, 7
        %v602 = vrot.slane %v564, 7
        %v603 = vrot.slane %v566, 7
        %v604 = vrot.slane %v568, 7
        %v605 = vrot.slane %v570, 7
        %v606 = vrot.slane %v572, 7
        %v607 = vrot.slane %v574, 7
        %v608 = vrot.slane %v576, 7
        %v609 = vrot.slane %v578, 7
        %v610 = vrot.slane %v580, 7
        %v611 = vrot.slane %v582, 7
        %v612 = vrot.slane %v584, 7
        %v613 = vrot.slane %v586, 7
        %v614 = vrot.slane %v588, 7
        %v615 = vrot.slane %v590, 7
        %v616 = vrot.slane %v592, 7
        %v617 = vrot.slane %v563, 7
        %v618 = vrot.slane %v565, 7
        %v619 = vrot.slane %v567, 7
        %v620 = vrot.slane %v569, 7
        %v621 = vrot.slane %v571, 7
        %v622 = vrot.slane %v573, 7
        %v623 = vrot.slane %v575, 7
        %v624 = vrot.slane %v577, 7
        %v625 = vrot.slane %v579, 7
        %v626 = vrot.slane %v581, 7
        %v627 = vrot.slane %v583, 7
        %v628 = vrot.slane %v585, 7
        %v629 = vrot.slane %v587, 7
        %v630 = vrot.slane %v589, 7
        %v631 = vrot.slane %v591, 7
        %v632 = vrot.slane %v593, 7
        %vm633 = vcmp.lt.s32.totalorder %v595, 1
        %v634 = vsel %vm633, %v601, %v617
        %v635 = vsel %vm633, %v602, %v618
        %v636 = vsel %vm633, %v603, %v619
        %v637 = vsel %vm633, %v604, %v620
        %v638 = vsel %vm633, %v605, %v621
        %v639 = vsel %vm633, %v606, %v622
        %v640 = vsel %vm633, %v607, %v623
        %v641 = vsel %vm633, %v608, %v624
        %v642 = vsel %vm633, %v609, %v625
        %v643 = vsel %vm633, %v610, %v626
        %v644 = vsel %vm633, %v611, %v627
        %v645 = vsel %vm633, %v612, %v628
        %v646 = vsel %vm633, %v613, %v629
        %v647 = vsel %vm633, %v614, %v630
        %v648 = vsel %vm633, %v615, %v631
        %v649 = vsel %vm633, %v616, %v632
        %v650 = vsel %vm633, %v617, %v601
        %v651 = vsel %vm633, %v618, %v602
        %v652 = vsel %vm633, %v619, %v603
        %v653 = vsel %vm633, %v620, %v604
        %v654 = vsel %vm633, %v621, %v605
        %v655 = vsel %vm633, %v622, %v606
        %v656 = vsel %vm633, %v623, %v607
        %v657 = vsel %vm633, %v624, %v608
        %v658 = vsel %vm633, %v625, %v609
        %v659 = vsel %vm633, %v626, %v610
        %v660 = vsel %vm633, %v627, %v611
        %v661 = vsel %vm633, %v628, %v612
        %v662 = vsel %vm633, %v629, %v613
        %v663 = vsel %vm633, %v630, %v614
        %v664 = vsel %vm633, %v631, %v615
        %v665 = vsel %vm633, %v632, %v616
        %v666 = vsel %vm597, %v650, 0.0
        %v667 = vsel %vm598, %v634, 0.0
        %v668 = vsel %vm597, %v651, 0.0
        %v669 = vsel %vm598, %v635, 0.0
        %v670 = vsel %vm597, %v652, 0.0
        %v671 = vsel %vm598, %v636, 0.0
        %v672 = vsel %vm597, %v653, 0.0
        %v673 = vsel %vm598, %v637, 0.0
        %v674 = vsel %vm597, %v654, 0.0
        %v675 = vsel %vm598, %v638, 0.0
        %v676 = vsel %vm597, %v655, 0.0
        %v677 = vsel %vm598, %v639, 0.0
        %v678 = vsel %vm597, %v656, 0.0
        %v679 = vsel %vm598, %v640, 0.0
        %v680 = vsel %vm597, %v657, 0.0
        %v681 = vsel %vm598, %v641, 0.0
        %v682 = vsel %vm597, %v658, 0.0
        %v683 = vsel %vm598, %v642, 0.0
        %v684 = vsel %vm597, %v659, 0.0
        %v685 = vsel %vm598, %v643, 0.0
        %v686 = vsel %vm597, %v660, 0.0
        %v687 = vsel %vm598, %v644, 0.0
        %v688 = vsel %vm597, %v661, 0.0
        %v689 = vsel %vm598, %v645, 0.0
        %v690 = vsel %vm597, %v662, 0.0
        %v691 = vsel %vm598, %v646, 0.0
        %v692 = vsel %vm597, %v663, 0.0
        %v693 = vsel %vm598, %v647, 0.0
        %v694 = vsel %vm597, %v664, 0.0
        %v695 = vsel %vm598, %v648, 0.0
        %v696 = vsel %vm597, %v665, 0.0
        %v697 = vsel %vm598, %v649, 0.0
        %v698 = vrot.slane %v562, 1
        %v699 = vrot.slane %v564, 1
        %v700 = vrot.slane %v566, 1
        %v701 = vrot.slane %v568, 1
        %v702 = vrot.slane %v570, 1
        %v703 = vrot.slane %v572, 1
        %v704 = vrot.slane %v574, 1
        %v705 = vrot.slane %v576, 1
        %v706 = vrot.slane %v578, 1
        %v707 = vrot.slane %v580, 1
        %v708 = vrot.slane %v582, 1
        %v709 = vrot.slane %v584, 1
        %v710 = vrot.slane %v586, 1
        %v711 = vrot.slane %v588, 1
        %v712 = vrot.slane %v590, 1
        %v713 = vrot.slane %v592, 1
        %v714 = vrot.slane %v563, 1
        %v715 = vrot.slane %v565, 1
        %v716 = vrot.slane %v567, 1
        %v717 = vrot.slane %v569, 1
        %v718 = vrot.slane %v571, 1
        %v719 = vrot.slane %v573, 1
        %v720 = vrot.slane %v575, 1
        %v721 = vrot.slane %v577, 1
        %v722 = vrot.slane %v579, 1
        %v723 = vrot.slane %v581, 1
        %v724 = vrot.slane %v583, 1
        %v725 = vrot.slane %v585, 1
        %v726 = vrot.slane %v587, 1
        %v727 = vrot.slane %v589, 1
        %v728 = vrot.slane %v591, 1
        %v729 = vrot.slane %v593, 1
        %vm730 = vcmp.lt.s32.totalorder %v595, 7
        %v731 = vsel %vm730, %v698, %v714
        %v732 = vsel %vm730, %v699, %v715
        %v733 = vsel %vm730, %v700, %v716
        %v734 = vsel %vm730, %v701, %v717
        %v735 = vsel %vm730, %v702, %v718
        %v736 = vsel %vm730, %v703, %v719
        %v737 = vsel %vm730, %v704, %v720
        %v738 = vsel %vm730, %v705, %v721
        %v739 = vsel %vm730, %v706, %v722
        %v740 = vsel %vm730, %v707, %v723
        %v741 = vsel %vm730, %v708, %v724
        %v742 = vsel %vm730, %v709, %v725
        %v743 = vsel %vm730, %v710, %v726
        %v744 = vsel %vm730, %v711, %v727
        %v745 = vsel %vm730, %v712, %v728
        %v746 = vsel %vm730, %v713, %v729
        %v747 = vsel %vm730, %v714, %v698
        %v748 = vsel %vm730, %v715, %v699
        %v749 = vsel %vm730, %v716, %v700
        %v750 = vsel %vm730, %v717, %v701
        %v751 = vsel %vm730, %v718, %v702
        %v752 = vsel %vm730, %v719, %v703
        %v753 = vsel %vm730, %v720, %v704
        %v754 = vsel %vm730, %v721, %v705
        %v755 = vsel %vm730, %v722, %v706
        %v756 = vsel %vm730, %v723, %v707
        %v757 = vsel %vm730, %v724, %v708
        %v758 = vsel %vm730, %v725, %v709
        %v759 = vsel %vm730, %v726, %v710
        %v760 = vsel %vm730, %v727, %v711
        %v761 = vsel %vm730, %v728, %v712
        %v762 = vsel %vm730, %v729, %v713
        %v763 = vsel %vm599, %v731, 0.0
        %v764 = vsel %vm600, %v747, 0.0
        %v765 = vsel %vm599, %v732, 0.0
        %v766 = vsel %vm600, %v748, 0.0
        %v767 = vsel %vm599, %v733, 0.0
        %v768 = vsel %vm600, %v749, 0.0
        %v769 = vsel %vm599, %v734, 0.0
        %v770 = vsel %vm600, %v750, 0.0
        %v771 = vsel %vm599, %v735, 0.0
        %v772 = vsel %vm600, %v751, 0.0
        %v773 = vsel %vm599, %v736, 0.0
        %v774 = vsel %vm600, %v752, 0.0
        %v775 = vsel %vm599, %v737, 0.0
        %v776 = vsel %vm600, %v753, 0.0
        %v777 = vsel %vm599, %v738, 0.0
        %v778 = vsel %vm600, %v754, 0.0
        %v779 = vsel %vm599, %v739, 0.0
        %v780 = vsel %vm600, %v755, 0.0
        %v781 = vsel %vm599, %v740, 0.0
        %v782 = vsel %vm600, %v756, 0.0
        %v783 = vsel %vm599, %v741, 0.0
        %v784 = vsel %vm600, %v757, 0.0
        %v785 = vsel %vm599, %v742, 0.0
        %v786 = vsel %vm600, %v758, 0.0
        %v787 = vsel %vm599, %v743, 0.0
        %v788 = vsel %vm600, %v759, 0.0
        %v789 = vsel %vm599, %v744, 0.0
        %v790 = vsel %vm600, %v760, 0.0
        %v791 = vsel %vm599, %v745, 0.0
        %v792 = vsel %vm600, %v761, 0.0
        %v793 = vsel %vm599, %v746, 0.0
        %v794 = vsel %vm600, %v762, 0.0
        %v795 = vpack.c.bf16 %v666, %v666
        %v796 = vpack.c.bf16 %v667, %v667
        %v797 = vpack.c.bf16 %v668, %v668
        %v798 = vpack.c.bf16 %v669, %v669
        %v799 = vpack.c.bf16 %v670, %v670
        %v800 = vpack.c.bf16 %v671, %v671
        %v801 = vpack.c.bf16 %v672, %v672
        %v802 = vpack.c.bf16 %v673, %v673
        %v803 = vpack.c.bf16 %v674, %v674
        %v804 = vpack.c.bf16 %v675, %v675
        %v805 = vpack.c.bf16 %v676, %v676
        %v806 = vpack.c.bf16 %v677, %v677
        %v807 = vpack.c.bf16 %v678, %v678
        %v808 = vpack.c.bf16 %v679, %v679
        %v809 = vpack.c.bf16 %v680, %v680
        %v810 = vpack.c.bf16 %v681, %v681
        %v811 = vpack.c.bf16 %v682, %v682
        %v812 = vpack.c.bf16 %v683, %v683
        %v813 = vpack.c.bf16 %v684, %v684
        %v814 = vpack.c.bf16 %v685, %v685
        %v815 = vpack.c.bf16 %v686, %v686
        %v816 = vpack.c.bf16 %v687, %v687
        %v817 = vpack.c.bf16 %v688, %v688
        %v818 = vpack.c.bf16 %v689, %v689
        %v819 = vpack.c.bf16 %v690, %v690
        %v820 = vpack.c.bf16 %v691, %v691
        %v821 = vpack.c.bf16 %v692, %v692
        %v822 = vpack.c.bf16 %v693, %v693
        %v823 = vpack.c.bf16 %v694, %v694
        %v824 = vpack.c.bf16 %v695, %v695
        %v825 = vpack.c.bf16 %v696, %v696
        %v826 = vpack.c.bf16 %v697, %v697
        %v827 = vpack.c.bf16 %v562, %v562
        %v828 = vpack.c.bf16 %v563, %v563
        %v829 = vpack.c.bf16 %v564, %v564
        %v830 = vpack.c.bf16 %v565, %v565
        %v831 = vpack.c.bf16 %v566, %v566
        %v832 = vpack.c.bf16 %v567, %v567
        %v833 = vpack.c.bf16 %v568, %v568
        %v834 = vpack.c.bf16 %v569, %v569
        %v835 = vpack.c.bf16 %v570, %v570
        %v836 = vpack.c.bf16 %v571, %v571
        %v837 = vpack.c.bf16 %v572, %v572
        %v838 = vpack.c.bf16 %v573, %v573
        %v839 = vpack.c.bf16 %v574, %v574
        %v840 = vpack.c.bf16 %v575, %v575
        %v841 = vpack.c.bf16 %v576, %v576
        %v842 = vpack.c.bf16 %v577, %v577
        %v843 = vpack.c.bf16 %v578, %v578
        %v844 = vpack.c.bf16 %v579, %v579
        %v845 = vpack.c.bf16 %v580, %v580
        %v846 = vpack.c.bf16 %v581, %v581
        %v847 = vpack.c.bf16 %v582, %v582
        %v848 = vpack.c.bf16 %v583, %v583
        %v849 = vpack.c.bf16 %v584, %v584
        %v850 = vpack.c.bf16 %v585, %v585
        %v851 = vpack.c.bf16 %v586, %v586
        %v852 = vpack.c.bf16 %v587, %v587
        %v853 = vpack.c.bf16 %v588, %v588
        %v854 = vpack.c.bf16 %v589, %v589
        %v855 = vpack.c.bf16 %v590, %v590
        %v856 = vpack.c.bf16 %v591, %v591
        %v857 = vpack.c.bf16 %v592, %v592
        %v858 = vpack.c.bf16 %v593, %v593
        %v859 = vpack.c.bf16 %v763, %v763
        %v860 = vpack.c.bf16 %v764, %v764
        %v861 = vpack.c.bf16 %v765, %v765
        %v862 = vpack.c.bf16 %v766, %v766
        %v863 = vpack.c.bf16 %v767, %v767
        %v864 = vpack.c.bf16 %v768, %v768
        %v865 = vpack.c.bf16 %v769, %v769
        %v866 = vpack.c.bf16 %v770, %v770
        %v867 = vpack.c.bf16 %v771, %v771
        %v868 = vpack.c.bf16 %v772, %v772
        %v869 = vpack.c.bf16 %v773, %v773
        %v870 = vpack.c.bf16 %v774, %v774
        %v871 = vpack.c.bf16 %v775, %v775
        %v872 = vpack.c.bf16 %v776, %v776
        %v873 = vpack.c.bf16 %v777, %v777
        %v874 = vpack.c.bf16 %v778, %v778
        %v875 = vpack.c.bf16 %v779, %v779
        %v876 = vpack.c.bf16 %v780, %v780
        %v877 = vpack.c.bf16 %v781, %v781
        %v878 = vpack.c.bf16 %v782, %v782
        %v879 = vpack.c.bf16 %v783, %v783
        %v880 = vpack.c.bf16 %v784, %v784
        %v881 = vpack.c.bf16 %v785, %v785
        %v882 = vpack.c.bf16 %v786, %v786
        %v883 = vpack.c.bf16 %v787, %v787
        %v884 = vpack.c.bf16 %v788, %v788
        %v885 = vpack.c.bf16 %v789, %v789
        %v886 = vpack.c.bf16 %v790, %v790
        %v887 = vpack.c.bf16 %v791, %v791
        %v888 = vpack.c.bf16 %v792, %v792
        %v889 = vpack.c.bf16 %v793, %v793
        %v890 = vpack.c.bf16 %v794, %v794
        %v921 = vunpack.c.l.b16 %v795
        %v922 = vunpack.c.l.b16 %v796
        %v923 = vunpack.c.l.b16 %v797
        %v924 = vunpack.c.l.b16 %v798
        %v925 = vunpack.c.l.b16 %v799
        %v926 = vunpack.c.l.b16 %v800
        %v927 = vunpack.c.l.b16 %v801
        %v928 = vunpack.c.l.b16 %v802
        %v929 = vunpack.c.l.b16 %v803
        %v930 = vunpack.c.l.b16 %v804
        %v931 = vunpack.c.l.b16 %v805
        %v932 = vunpack.c.l.b16 %v806
        %v933 = vunpack.c.l.b16 %v807
        %v934 = vunpack.c.l.b16 %v808
        %v935 = vunpack.c.l.b16 %v809
        %v936 = vunpack.c.l.b16 %v810
        %v937 = vunpack.c.l.b16 %v811
        %v938 = vunpack.c.l.b16 %v812
        %v939 = vunpack.c.l.b16 %v813
        %v940 = vunpack.c.l.b16 %v814
        %v941 = vunpack.c.l.b16 %v815
        %v942 = vunpack.c.l.b16 %v816
        %v943 = vunpack.c.l.b16 %v817
        %v944 = vunpack.c.l.b16 %v818
        %v945 = vunpack.c.l.b16 %v819
        %v946 = vunpack.c.l.b16 %v820
        %v947 = vunpack.c.l.b16 %v821
        %v948 = vunpack.c.l.b16 %v822
        %v949 = vunpack.c.l.b16 %v823
        %v950 = vunpack.c.l.b16 %v824
        %v951 = vpack.c.b16 %v922, %v921
        %v952 = vpack.c.b16 %v924, %v923
        %v953 = vpack.c.b16 %v926, %v925
        %v954 = vpack.c.b16 %v928, %v927
        %v955 = vpack.c.b16 %v930, %v929
        %v956 = vpack.c.b16 %v932, %v931
        %v957 = vpack.c.b16 %v934, %v933
        %v958 = vpack.c.b16 %v936, %v935
        %v959 = vpack.c.b16 %v938, %v937
        %v960 = vpack.c.b16 %v940, %v939
        %v961 = vpack.c.b16 %v942, %v941
        %v962 = vpack.c.b16 %v944, %v943
        %v963 = vpack.c.b16 %v946, %v945
        %v964 = vpack.c.b16 %v948, %v947
        %v965 = vpack.c.b16 %v950, %v949
        %v996 = vunpack.c.l.b16 %v827
        %v997 = vunpack.c.l.b16 %v828
        %v998 = vunpack.c.l.b16 %v829
        %v999 = vunpack.c.l.b16 %v830
        %v1000 = vunpack.c.l.b16 %v831
        %v1001 = vunpack.c.l.b16 %v832
        %v1002 = vunpack.c.l.b16 %v833
        %v1003 = vunpack.c.l.b16 %v834
        %v1004 = vunpack.c.l.b16 %v835
        %v1005 = vunpack.c.l.b16 %v836
        %v1006 = vunpack.c.l.b16 %v837
        %v1007 = vunpack.c.l.b16 %v838
        %v1008 = vunpack.c.l.b16 %v839
        %v1009 = vunpack.c.l.b16 %v840
        %v1010 = vunpack.c.l.b16 %v841
        %v1011 = vunpack.c.l.b16 %v842
        %v1012 = vunpack.c.l.b16 %v843
        %v1013 = vunpack.c.l.b16 %v844
        %v1014 = vunpack.c.l.b16 %v845
        %v1015 = vunpack.c.l.b16 %v846
        %v1016 = vunpack.c.l.b16 %v847
        %v1017 = vunpack.c.l.b16 %v848
        %v1018 = vunpack.c.l.b16 %v849
        %v1019 = vunpack.c.l.b16 %v850
        %v1020 = vunpack.c.l.b16 %v851
        %v1021 = vunpack.c.l.b16 %v852
        %v1022 = vunpack.c.l.b16 %v853
        %v1023 = vunpack.c.l.b16 %v854
        %v1024 = vunpack.c.l.b16 %v855
        %v1025 = vunpack.c.l.b16 %v856
        %v1026 = vpack.c.b16 %v997, %v996
        %v1027 = vpack.c.b16 %v999, %v998
        %v1028 = vpack.c.b16 %v1001, %v1000
        %v1029 = vpack.c.b16 %v1003, %v1002
        %v1030 = vpack.c.b16 %v1005, %v1004
        %v1031 = vpack.c.b16 %v1007, %v1006
        %v1032 = vpack.c.b16 %v1009, %v1008
        %v1033 = vpack.c.b16 %v1011, %v1010
        %v1034 = vpack.c.b16 %v1013, %v1012
        %v1035 = vpack.c.b16 %v1015, %v1014
        %v1036 = vpack.c.b16 %v1017, %v1016
        %v1037 = vpack.c.b16 %v1019, %v1018
        %v1038 = vpack.c.b16 %v1021, %v1020
        %v1039 = vpack.c.b16 %v1023, %v1022
        %v1040 = vpack.c.b16 %v1025, %v1024
        %v1071 = vunpack.c.l.b16 %v859
        %v1072 = vunpack.c.l.b16 %v860
        %v1073 = vunpack.c.l.b16 %v861
        %v1074 = vunpack.c.l.b16 %v862
        %v1075 = vunpack.c.l.b16 %v863
        %v1076 = vunpack.c.l.b16 %v864
        %v1077 = vunpack.c.l.b16 %v865
        %v1078 = vunpack.c.l.b16 %v866
        %v1079 = vunpack.c.l.b16 %v867
        %v1080 = vunpack.c.l.b16 %v868
        %v1081 = vunpack.c.l.b16 %v869
        %v1082 = vunpack.c.l.b16 %v870
        %v1083 = vunpack.c.l.b16 %v871
        %v1084 = vunpack.c.l.b16 %v872
        %v1085 = vunpack.c.l.b16 %v873
        %v1086 = vunpack.c.l.b16 %v874
        %v1087 = vunpack.c.l.b16 %v875
        %v1088 = vunpack.c.l.b16 %v876
        %v1089 = vunpack.c.l.b16 %v877
        %v1090 = vunpack.c.l.b16 %v878
        %v1091 = vunpack.c.l.b16 %v879
        %v1092 = vunpack.c.l.b16 %v880
        %v1093 = vunpack.c.l.b16 %v881
        %v1094 = vunpack.c.l.b16 %v882
        %v1095 = vunpack.c.l.b16 %v883
        %v1096 = vunpack.c.l.b16 %v884
        %v1097 = vunpack.c.l.b16 %v885
        %v1098 = vunpack.c.l.b16 %v886
        %v1099 = vunpack.c.l.b16 %v887
        %v1100 = vunpack.c.l.b16 %v888
        %v1101 = vpack.c.b16 %v1072, %v1071
        %v1102 = vpack.c.b16 %v1074, %v1073
        %v1103 = vpack.c.b16 %v1076, %v1075
        %v1104 = vpack.c.b16 %v1078, %v1077
        %v1105 = vpack.c.b16 %v1080, %v1079
        %v1106 = vpack.c.b16 %v1082, %v1081
        %v1107 = vpack.c.b16 %v1084, %v1083
        %v1108 = vpack.c.b16 %v1086, %v1085
        %v1109 = vpack.c.b16 %v1088, %v1087
        %v1110 = vpack.c.b16 %v1090, %v1089
        %v1111 = vpack.c.b16 %v1092, %v1091
        %v1112 = vpack.c.b16 %v1094, %v1093
        %v1113 = vpack.c.b16 %v1096, %v1095
        %v1114 = vpack.c.b16 %v1098, %v1097
        %v1115 = vpack.c.b16 %v1100, %v1099
        %1117 = vrot.lane.b32.xlu0 0, 4
        %v1118 = vpop.permute.xlu0 %1117
        %1119 = vrot.lane.b32.xlu0 %v1026, 4
        %v1120 = vpop.permute.xlu0 %1119
        %1121 = vrot.lane.b32.xlu0 %v1027, 4
        %v1122 = vpop.permute.xlu0 %1121
        %1123 = vrot.lane.b32.xlu0 %v1028, 4
        %v1124 = vpop.permute.xlu0 %1123
        %1125 = vrot.lane.b32.xlu0 %v1029, 4
        %v1126 = vpop.permute.xlu0 %1125
        %1127 = vrot.lane.b32.xlu0 %v1030, 4
        %v1128 = vpop.permute.xlu0 %1127
        %1129 = vrot.lane.b32.xlu0 %v1031, 4
        %v1130 = vpop.permute.xlu0 %1129
        %1131 = vrot.lane.b32.xlu0 %v1032, 4
        %v1132 = vpop.permute.xlu0 %1131
        %1133 = vrot.lane.b32.xlu0 %v1033, 4
        %v1134 = vpop.permute.xlu0 %1133
        %1135 = vrot.lane.b32.xlu0 %v1034, 4
        %v1136 = vpop.permute.xlu0 %1135
        %1137 = vrot.lane.b32.xlu0 %v1035, 4
        %v1138 = vpop.permute.xlu0 %1137
        %1139 = vrot.lane.b32.xlu0 %v1036, 4
        %v1140 = vpop.permute.xlu0 %1139
        %1141 = vrot.lane.b32.xlu0 %v1037, 4
        %v1142 = vpop.permute.xlu0 %1141
        %1143 = vrot.lane.b32.xlu0 %v1038, 4
        %v1144 = vpop.permute.xlu0 %1143
        %1145 = vrot.lane.b32.xlu0 %v1039, 4
        %v1146 = vpop.permute.xlu0 %1145
        %1147 = vrot.lane.b32.xlu0 %v1040, 4
        %v1148 = vpop.permute.xlu0 %1147
        %1149 = vrot.lane.b32.xlu0 0, 8
        %v1150 = vpop.permute.xlu0 %1149
        %1151 = vrot.lane.b32.xlu0 %v1101, 8
        %v1152 = vpop.permute.xlu0 %1151
        %1153 = vrot.lane.b32.xlu0 %v1102, 8
        %v1154 = vpop.permute.xlu0 %1153
        %1155 = vrot.lane.b32.xlu0 %v1103, 8
        %v1156 = vpop.permute.xlu0 %1155
        %1157 = vrot.lane.b32.xlu0 %v1104, 8
        %v1158 = vpop.permute.xlu0 %1157
        %1159 = vrot.lane.b32.xlu0 %v1105, 8
        %v1160 = vpop.permute.xlu0 %1159
        %1161 = vrot.lane.b32.xlu0 %v1106, 8
        %v1162 = vpop.permute.xlu0 %1161
        %1163 = vrot.lane.b32.xlu0 %v1107, 8
        %v1164 = vpop.permute.xlu0 %1163
        %1165 = vrot.lane.b32.xlu0 %v1108, 8
        %v1166 = vpop.permute.xlu0 %1165
        %1167 = vrot.lane.b32.xlu0 %v1109, 8
        %v1168 = vpop.permute.xlu0 %1167
        %1169 = vrot.lane.b32.xlu0 %v1110, 8
        %v1170 = vpop.permute.xlu0 %1169
        %1171 = vrot.lane.b32.xlu0 %v1111, 8
        %v1172 = vpop.permute.xlu0 %1171
        %1173 = vrot.lane.b32.xlu0 %v1112, 8
        %v1174 = vpop.permute.xlu0 %1173
        %1175 = vrot.lane.b32.xlu0 %v1113, 8
        %v1176 = vpop.permute.xlu0 %1175
        %1177 = vrot.lane.b32.xlu0 %v1114, 8
        %v1178 = vpop.permute.xlu0 %1177
        %1179 = vrot.lane.b32.xlu0 %v1115, 8
        %v1180 = vpop.permute.xlu0 %1179
        %v1183 = vunpack.c.l.b16 %v825
        %v1184 = vunpack.c.l.b16 %v826
        %v1185 = vpack.c.b16 %v1184, %v1183
        %1186 = vrot.lane.b32.xlu0 %v951, 12
        %v1187 = vpop.permute.xlu0 %1186
        %1188 = vrot.lane.b32.xlu0 %v952, 12
        %v1189 = vpop.permute.xlu0 %1188
        %1190 = vrot.lane.b32.xlu0 %v953, 12
        %v1191 = vpop.permute.xlu0 %1190
        %1192 = vrot.lane.b32.xlu0 %v954, 12
        %v1193 = vpop.permute.xlu0 %1192
        %1194 = vrot.lane.b32.xlu0 %v955, 12
        %v1195 = vpop.permute.xlu0 %1194
        %1196 = vrot.lane.b32.xlu0 %v956, 12
        %v1197 = vpop.permute.xlu0 %1196
        %1198 = vrot.lane.b32.xlu0 %v957, 12
        %v1199 = vpop.permute.xlu0 %1198
        %1200 = vrot.lane.b32.xlu0 %v958, 12
        %v1201 = vpop.permute.xlu0 %1200
        %1202 = vrot.lane.b32.xlu0 %v959, 12
        %v1203 = vpop.permute.xlu0 %1202
        %1204 = vrot.lane.b32.xlu0 %v960, 12
        %v1205 = vpop.permute.xlu0 %1204
        %1206 = vrot.lane.b32.xlu0 %v961, 12
        %v1207 = vpop.permute.xlu0 %1206
        %1208 = vrot.lane.b32.xlu0 %v962, 12
        %v1209 = vpop.permute.xlu0 %1208
        %1210 = vrot.lane.b32.xlu0 %v963, 12
        %v1211 = vpop.permute.xlu0 %1210
        %1212 = vrot.lane.b32.xlu0 %v964, 12
        %v1213 = vpop.permute.xlu0 %1212
        %1214 = vrot.lane.b32.xlu0 %v965, 12
        %v1215 = vpop.permute.xlu0 %1214
        %1216 = vrot.lane.b32.xlu0 %v1185, 12
        %v1217 = vpop.permute.xlu0 %1216
        %v1220 = vunpack.c.l.b16 %v857
        %v1221 = vunpack.c.l.b16 %v858
        %v1222 = vpack.c.b16 %v1221, %v1220
        %1223 = vrot.lane.b32.xlu0 %v1026, 16
        %v1224 = vpop.permute.xlu0 %1223
        %1225 = vrot.lane.b32.xlu0 %v1027, 16
        %v1226 = vpop.permute.xlu0 %1225
        %1227 = vrot.lane.b32.xlu0 %v1028, 16
        %v1228 = vpop.permute.xlu0 %1227
        %1229 = vrot.lane.b32.xlu0 %v1029, 16
        %v1230 = vpop.permute.xlu0 %1229
        %1231 = vrot.lane.b32.xlu0 %v1030, 16
        %v1232 = vpop.permute.xlu0 %1231
        %1233 = vrot.lane.b32.xlu0 %v1031, 16
        %v1234 = vpop.permute.xlu0 %1233
        %1235 = vrot.lane.b32.xlu0 %v1032, 16
        %v1236 = vpop.permute.xlu0 %1235
        %1237 = vrot.lane.b32.xlu0 %v1033, 16
        %v1238 = vpop.permute.xlu0 %1237
        %1239 = vrot.lane.b32.xlu0 %v1034, 16
        %v1240 = vpop.permute.xlu0 %1239
        %1241 = vrot.lane.b32.xlu0 %v1035, 16
        %v1242 = vpop.permute.xlu0 %1241
        %1243 = vrot.lane.b32.xlu0 %v1036, 16
        %v1244 = vpop.permute.xlu0 %1243
        %1245 = vrot.lane.b32.xlu0 %v1037, 16
        %v1246 = vpop.permute.xlu0 %1245
        %1247 = vrot.lane.b32.xlu0 %v1038, 16
        %v1248 = vpop.permute.xlu0 %1247
        %1249 = vrot.lane.b32.xlu0 %v1039, 16
        %v1250 = vpop.permute.xlu0 %1249
        %1251 = vrot.lane.b32.xlu0 %v1040, 16
        %v1252 = vpop.permute.xlu0 %1251
        %1253 = vrot.lane.b32.xlu0 %v1222, 16
        %v1254 = vpop.permute.xlu0 %1253
        %v1257 = vunpack.c.l.b16 %v889
        %v1258 = vunpack.c.l.b16 %v890
        %v1259 = vpack.c.b16 %v1258, %v1257
        %1260 = vrot.lane.b32.xlu0 %v1101, 20
        %v1261 = vpop.permute.xlu0 %1260
        %1262 = vrot.lane.b32.xlu0 %v1102, 20
        %v1263 = vpop.permute.xlu0 %1262
        %1264 = vrot.lane.b32.xlu0 %v1103, 20
        %v1265 = vpop.permute.xlu0 %1264
        %1266 = vrot.lane.b32.xlu0 %v1104, 20
        %v1267 = vpop.permute.xlu0 %1266
        %1268 = vrot.lane.b32.xlu0 %v1105, 20
        %v1269 = vpop.permute.xlu0 %1268
        %1270 = vrot.lane.b32.xlu0 %v1106, 20
        %v1271 = vpop.permute.xlu0 %1270
        %1272 = vrot.lane.b32.xlu0 %v1107, 20
        %v1273 = vpop.permute.xlu0 %1272
        %1274 = vrot.lane.b32.xlu0 %v1108, 20
        %v1275 = vpop.permute.xlu0 %1274
        %1276 = vrot.lane.b32.xlu0 %v1109, 20
        %v1277 = vpop.permute.xlu0 %1276
        %1278 = vrot.lane.b32.xlu0 %v1110, 20
        %v1279 = vpop.permute.xlu0 %1278
        %1280 = vrot.lane.b32.xlu0 %v1111, 20
        %v1281 = vpop.permute.xlu0 %1280
        %1282 = vrot.lane.b32.xlu0 %v1112, 20
        %v1283 = vpop.permute.xlu0 %1282
        %1284 = vrot.lane.b32.xlu0 %v1113, 20
        %v1285 = vpop.permute.xlu0 %1284
        %1286 = vrot.lane.b32.xlu0 %v1114, 20
        %v1287 = vpop.permute.xlu0 %1286
        %1288 = vrot.lane.b32.xlu0 %v1115, 20
        %v1289 = vpop.permute.xlu0 %1288
        %1290 = vrot.lane.b32.xlu0 %v1259, 20
        %v1291 = vpop.permute.xlu0 %1290
        %v1292 = vunpack.c.l.b16 0
        %v1293 = vpack.c.b16 %v1292, %v1292
        %1294 = vrot.lane.b32.xlu0 %v952, 24
        %v1295 = vpop.permute.xlu0 %1294
        %1296 = vrot.lane.b32.xlu0 %v953, 24
        %v1297 = vpop.permute.xlu0 %1296
        %1298 = vrot.lane.b32.xlu0 %v954, 24
        %v1299 = vpop.permute.xlu0 %1298
        %1300 = vrot.lane.b32.xlu0 %v955, 24
        %v1301 = vpop.permute.xlu0 %1300
        %1302 = vrot.lane.b32.xlu0 %v956, 24
        %v1303 = vpop.permute.xlu0 %1302
        %1304 = vrot.lane.b32.xlu0 %v957, 24
        %v1305 = vpop.permute.xlu0 %1304
        %1306 = vrot.lane.b32.xlu0 %v958, 24
        %v1307 = vpop.permute.xlu0 %1306
        %1308 = vrot.lane.b32.xlu0 %v959, 24
        %v1309 = vpop.permute.xlu0 %1308
        %1310 = vrot.lane.b32.xlu0 %v960, 24
        %v1311 = vpop.permute.xlu0 %1310
        %1312 = vrot.lane.b32.xlu0 %v961, 24
        %v1313 = vpop.permute.xlu0 %1312
        %1314 = vrot.lane.b32.xlu0 %v962, 24
        %v1315 = vpop.permute.xlu0 %1314
        %1316 = vrot.lane.b32.xlu0 %v963, 24
        %v1317 = vpop.permute.xlu0 %1316
        %1318 = vrot.lane.b32.xlu0 %v964, 24
        %v1319 = vpop.permute.xlu0 %1318
        %1320 = vrot.lane.b32.xlu0 %v965, 24
        %v1321 = vpop.permute.xlu0 %1320
        %1322 = vrot.lane.b32.xlu0 %v1185, 24
        %v1323 = vpop.permute.xlu0 %1322
        %1324 = vrot.lane.b32.xlu0 %v1293, 24
        %v1325 = vpop.permute.xlu0 %1324
        %1326 = vrot.lane.b32.xlu0 %v1027, 28
        %v1327 = vpop.permute.xlu0 %1326
        %1328 = vrot.lane.b32.xlu0 %v1028, 28
        %v1329 = vpop.permute.xlu0 %1328
        %1330 = vrot.lane.b32.xlu0 %v1029, 28
        %v1331 = vpop.permute.xlu0 %1330
        %1332 = vrot.lane.b32.xlu0 %v1030, 28
        %v1333 = vpop.permute.xlu0 %1332
        %1334 = vrot.lane.b32.xlu0 %v1031, 28
        %v1335 = vpop.permute.xlu0 %1334
        %1336 = vrot.lane.b32.xlu0 %v1032, 28
        %v1337 = vpop.permute.xlu0 %1336
        %1338 = vrot.lane.b32.xlu0 %v1033, 28
        %v1339 = vpop.permute.xlu0 %1338
        %1340 = vrot.lane.b32.xlu0 %v1034, 28
        %v1341 = vpop.permute.xlu0 %1340
        %1342 = vrot.lane.b32.xlu0 %v1035, 28
        %v1343 = vpop.permute.xlu0 %1342
        %1344 = vrot.lane.b32.xlu0 %v1036, 28
        %v1345 = vpop.permute.xlu0 %1344
        %1346 = vrot.lane.b32.xlu0 %v1037, 28
        %v1347 = vpop.permute.xlu0 %1346
        %1348 = vrot.lane.b32.xlu0 %v1038, 28
        %v1349 = vpop.permute.xlu0 %1348
        %1350 = vrot.lane.b32.xlu0 %v1039, 28
        %v1351 = vpop.permute.xlu0 %1350
        %1352 = vrot.lane.b32.xlu0 %v1040, 28
        %v1353 = vpop.permute.xlu0 %1352
        %1354 = vrot.lane.b32.xlu0 %v1222, 28
        %v1355 = vpop.permute.xlu0 %1354
        %1356 = vrot.lane.b32.xlu0 %v1293, 28
        %v1357 = vpop.permute.xlu0 %1356
        %1358 = vrot.lane.b32.xlu0 %v1102, 32
        %v1359 = vpop.permute.xlu0 %1358
        %1360 = vrot.lane.b32.xlu0 %v1103, 32
        %v1361 = vpop.permute.xlu0 %1360
        %1362 = vrot.lane.b32.xlu0 %v1104, 32
        %v1363 = vpop.permute.xlu0 %1362
        %1364 = vrot.lane.b32.xlu0 %v1105, 32
        %v1365 = vpop.permute.xlu0 %1364
        %1366 = vrot.lane.b32.xlu0 %v1106, 32
        %v1367 = vpop.permute.xlu0 %1366
        %1368 = vrot.lane.b32.xlu0 %v1107, 32
        %v1369 = vpop.permute.xlu0 %1368
        %1370 = vrot.lane.b32.xlu0 %v1108, 32
        %v1371 = vpop.permute.xlu0 %1370
        %1372 = vrot.lane.b32.xlu0 %v1109, 32
        %v1373 = vpop.permute.xlu0 %1372
        %1374 = vrot.lane.b32.xlu0 %v1110, 32
        %v1375 = vpop.permute.xlu0 %1374
        %1376 = vrot.lane.b32.xlu0 %v1111, 32
        %v1377 = vpop.permute.xlu0 %1376
        %1378 = vrot.lane.b32.xlu0 %v1112, 32
        %v1379 = vpop.permute.xlu0 %1378
        %1380 = vrot.lane.b32.xlu0 %v1113, 32
        %v1381 = vpop.permute.xlu0 %1380
        %1382 = vrot.lane.b32.xlu0 %v1114, 32
        %v1383 = vpop.permute.xlu0 %1382
        %1384 = vrot.lane.b32.xlu0 %v1115, 32
        %v1385 = vpop.permute.xlu0 %1384
        %1386 = vrot.lane.b32.xlu0 %v1259, 32
        %v1387 = vpop.permute.xlu0 %1386
        %1388 = vrot.lane.b32.xlu0 %v1293, 32
        %v1389 = vpop.permute.xlu0 %1388
        %vm1390 = vcmask 31744
        %v1393 = vsel %vm1390, 0, %v1118
        %v1396 = vsel %vm1390, %v951, %v1120
        %v1399 = vsel %vm1390, %v952, %v1122
        %v1402 = vsel %vm1390, %v953, %v1124
        %v1405 = vsel %vm1390, %v954, %v1126
        %v1408 = vsel %vm1390, %v955, %v1128
        %v1411 = vsel %vm1390, %v956, %v1130
        %v1414 = vsel %vm1390, %v957, %v1132
        %v1417 = vsel %vm1390, %v958, %v1134
        %v1420 = vsel %vm1390, %v959, %v1136
        %v1423 = vsel %vm1390, %v960, %v1138
        %v1426 = vsel %vm1390, %v961, %v1140
        %v1429 = vsel %vm1390, %v962, %v1142
        %v1432 = vsel %vm1390, %v963, %v1144
        %v1435 = vsel %vm1390, %v964, %v1146
        %v1438 = vsel %vm1390, %v965, %v1148
        %vm1439 = vcmask 64512
        %v1441 = vsel %vm1439, %v1393, %v1150
        %v1443 = vsel %vm1439, %v1396, %v1152
        %v1445 = vsel %vm1439, %v1399, %v1154
        %v1447 = vsel %vm1439, %v1402, %v1156
        %v1449 = vsel %vm1439, %v1405, %v1158
        %v1451 = vsel %vm1439, %v1408, %v1160
        %v1453 = vsel %vm1439, %v1411, %v1162
        %v1455 = vsel %vm1439, %v1414, %v1164
        %v1457 = vsel %vm1439, %v1417, %v1166
        %v1459 = vsel %vm1439, %v1420, %v1168
        %v1461 = vsel %vm1439, %v1423, %v1170
        %v1463 = vsel %vm1439, %v1426, %v1172
        %v1465 = vsel %vm1439, %v1429, %v1174
        %v1467 = vsel %vm1439, %v1432, %v1176
        %v1469 = vsel %vm1439, %v1435, %v1178
        %v1471 = vsel %vm1439, %v1438, %v1180
        %vm1472 = vcmask 97280
        %v1474 = vsel %vm1472, %v1441, %v1187
        %v1476 = vsel %vm1472, %v1443, %v1189
        %v1478 = vsel %vm1472, %v1445, %v1191
        %v1480 = vsel %vm1472, %v1447, %v1193
        %v1482 = vsel %vm1472, %v1449, %v1195
        %v1484 = vsel %vm1472, %v1451, %v1197
        %v1486 = vsel %vm1472, %v1453, %v1199
        %v1488 = vsel %vm1472, %v1455, %v1201
        %v1490 = vsel %vm1472, %v1457, %v1203
        %v1492 = vsel %vm1472, %v1459, %v1205
        %v1494 = vsel %vm1472, %v1461, %v1207
        %v1496 = vsel %vm1472, %v1463, %v1209
        %v1498 = vsel %vm1472, %v1465, %v1211
        %v1500 = vsel %vm1472, %v1467, %v1213
        %v1502 = vsel %vm1472, %v1469, %v1215
        %v1504 = vsel %vm1472, %v1471, %v1217
        %v1506 = vsel %vm424, %v1474, %v1224
        %v1508 = vsel %vm424, %v1476, %v1226
        %v1510 = vsel %vm424, %v1478, %v1228
        %v1512 = vsel %vm424, %v1480, %v1230
        %v1514 = vsel %vm424, %v1482, %v1232
        %v1516 = vsel %vm424, %v1484, %v1234
        %v1518 = vsel %vm424, %v1486, %v1236
        %v1520 = vsel %vm424, %v1488, %v1238
        %v1522 = vsel %vm424, %v1490, %v1240
        %v1524 = vsel %vm424, %v1492, %v1242
        %v1526 = vsel %vm424, %v1494, %v1244
        %v1528 = vsel %vm424, %v1496, %v1246
        %v1530 = vsel %vm424, %v1498, %v1248
        %v1532 = vsel %vm424, %v1500, %v1250
        %v1534 = vsel %vm424, %v1502, %v1252
        %v1536 = vsel %vm424, %v1504, %v1254
        %vm1537 = vcmask 162816
        %v1539 = vsel %vm1537, %v1506, %v1261
        %v1541 = vsel %vm1537, %v1508, %v1263
        %v1543 = vsel %vm1537, %v1510, %v1265
        %v1545 = vsel %vm1537, %v1512, %v1267
        %v1547 = vsel %vm1537, %v1514, %v1269
        %v1549 = vsel %vm1537, %v1516, %v1271
        %v1551 = vsel %vm1537, %v1518, %v1273
        %v1553 = vsel %vm1537, %v1520, %v1275
        %v1555 = vsel %vm1537, %v1522, %v1277
        %v1557 = vsel %vm1537, %v1524, %v1279
        %v1559 = vsel %vm1537, %v1526, %v1281
        %v1561 = vsel %vm1537, %v1528, %v1283
        %v1563 = vsel %vm1537, %v1530, %v1285
        %v1565 = vsel %vm1537, %v1532, %v1287
        %v1567 = vsel %vm1537, %v1534, %v1289
        %v1569 = vsel %vm1537, %v1536, %v1291
        %vm1570 = vcmask 195584
        %v1572 = vsel %vm1570, %v1539, %v1295
        %v1574 = vsel %vm1570, %v1541, %v1297
        %v1576 = vsel %vm1570, %v1543, %v1299
        %v1578 = vsel %vm1570, %v1545, %v1301
        %v1580 = vsel %vm1570, %v1547, %v1303
        %v1582 = vsel %vm1570, %v1549, %v1305
        %v1584 = vsel %vm1570, %v1551, %v1307
        %v1586 = vsel %vm1570, %v1553, %v1309
        %v1588 = vsel %vm1570, %v1555, %v1311
        %v1590 = vsel %vm1570, %v1557, %v1313
        %v1592 = vsel %vm1570, %v1559, %v1315
        %v1594 = vsel %vm1570, %v1561, %v1317
        %v1596 = vsel %vm1570, %v1563, %v1319
        %v1598 = vsel %vm1570, %v1565, %v1321
        %v1600 = vsel %vm1570, %v1567, %v1323
        %v1602 = vsel %vm1570, %v1569, %v1325
        %vm1603 = vcmask 228352
        %v1605 = vsel %vm1603, %v1572, %v1327
        %v1607 = vsel %vm1603, %v1574, %v1329
        %v1609 = vsel %vm1603, %v1576, %v1331
        %v1611 = vsel %vm1603, %v1578, %v1333
        %v1613 = vsel %vm1603, %v1580, %v1335
        %v1615 = vsel %vm1603, %v1582, %v1337
        %v1617 = vsel %vm1603, %v1584, %v1339
        %v1619 = vsel %vm1603, %v1586, %v1341
        %v1621 = vsel %vm1603, %v1588, %v1343
        %v1623 = vsel %vm1603, %v1590, %v1345
        %v1625 = vsel %vm1603, %v1592, %v1347
        %v1627 = vsel %vm1603, %v1594, %v1349
        %v1629 = vsel %vm1603, %v1596, %v1351
        %v1631 = vsel %vm1603, %v1598, %v1353
        %v1633 = vsel %vm1603, %v1600, %v1355
        %v1635 = vsel %vm1603, %v1602, %v1357
        %vm1636 = vcmask 261120
        %v1638 = vsel %vm1636, %v1605, %v1359
        %v1640 = vsel %vm1636, %v1607, %v1361
        %v1642 = vsel %vm1636, %v1609, %v1363
        %v1644 = vsel %vm1636, %v1611, %v1365
        %v1646 = vsel %vm1636, %v1613, %v1367
        %v1648 = vsel %vm1636, %v1615, %v1369
        %v1650 = vsel %vm1636, %v1617, %v1371
        %v1652 = vsel %vm1636, %v1619, %v1373
        %v1654 = vsel %vm1636, %v1621, %v1375
        %v1656 = vsel %vm1636, %v1623, %v1377
        %v1658 = vsel %vm1636, %v1625, %v1379
        %v1660 = vsel %vm1636, %v1627, %v1381
        %v1662 = vsel %vm1636, %v1629, %v1383
        %v1664 = vsel %vm1636, %v1631, %v1385
        %v1666 = vsel %vm1636, %v1633, %v1387
        %v1668 = vsel %vm1636, %v1635, %v1389
        %v1669 = vld [vmem:[%s3] sm:$0xf]
        %v1670 = vld [vmem:[%s3 + $0x4] sm:$0xf]
        %v1671 = vld [vmem:[%s3 + $0x8] sm:$0xf]
        %v1672 = vld [vmem:[%s3 + $0xc] sm:$0xf]
        %v1673 = vld [vmem:[%s3 + $0x10] sm:$0x3]
        %v1674 = vld [vmem:[%s4] sm:$0x1]
        %v1676 = vperm.slane %v1674, 0
        %v1683 = vunpack.c.l.b16 %v1669
        %v1684 = vunpack.c.l.b16 %v1670
        %v1685 = vunpack.c.l.b16 %v1671
        %v1686 = vunpack.c.l.b16 %v1672
        %v1687 = vunpack.c.l.b16 %v1673
        %v1688 = vpack.c.b16 %v1684, %v1683
        %v1689 = vpack.c.b16 %v1686, %v1685
        %v1690 = vpack.c.b16 %v1687, %v1687
        %vm1693 = vcmask 293888
        %v1694 = vsel %vm1693, %v1638, 0
        %v1696 = vsel %vm1693, %v1640, 0
        %v1698 = vsel %vm1693, %v1642, 0
        %v1700 = vsel %vm1693, %v1644, 0
        %v1702 = vsel %vm1693, %v1646, 0
        %v1704 = vsel %vm1693, %v1648, 0
        %v1706 = vsel %vm1693, %v1650, 0
        %v1708 = vsel %vm1693, %v1652, 0
        %v1710 = vsel %vm1693, %v1654, 0
        %v1712 = vsel %vm1693, %v1656, 0
        %v1714 = vsel %vm1693, %v1658, 0
        %v1716 = vsel %vm1693, %v1660, 0
        %v1718 = vsel %vm1693, %v1662, 0
        %v1720 = vsel %vm1693, %v1664, 0
        %v1722 = vsel %vm1693, %v1666, 0
        %v1724 = vsel %vm1693, %v1668, 0
        %vm1726 = vcmask 1041408
        %v1728 = vsel %vm1726, %v1690, 0
        %1730 = vmatpush.bf16.msra.mxu0 0
        %1731 = vmatpush.bf16.msra.mxu0 0
        %1732 = vmatpush.bf16.msra.mxu0 0
        %1733 = vmatpush.bf16.msra.mxu0 0
        %1734 = vmatpush.bf16.msra.mxu0 0
        %1735 = vmatpush.bf16.msra.mxu0 %v1728
        %1736 = vmatpush.bf16.msra.mxu0 %v1689
        %1737 = vmatpush.bf16.msra.mxu0 %v1688
        %1738 = vmatmul.bf16.gmra.mxu0 %v1694
        %v1739 = vpop.f32.mrf.mxu0
        %v1740 = vadd.f32 %v1676, %v1739
        %v1741 = vpop.f32.mrf.mxu0
        %v1742 = vadd.f32 %v1676, %v1741
        %1743 = vmatmul.bf16.gmra.mxu0 %v1696
        %v1744 = vpop.f32.mrf.mxu0
        %v1745 = vadd.f32 %v1676, %v1744
        %v1746 = vpop.f32.mrf.mxu0
        %v1747 = vadd.f32 %v1676, %v1746
        %1748 = vmatmul.bf16.gmra.mxu0 %v1698
        %v1749 = vpop.f32.mrf.mxu0
        %v1750 = vadd.f32 %v1676, %v1749
        %v1751 = vpop.f32.mrf.mxu0
        %v1752 = vadd.f32 %v1676, %v1751
        %1753 = vmatmul.bf16.gmra.mxu0 %v1700
        %v1754 = vpop.f32.mrf.mxu0
        %v1755 = vadd.f32 %v1676, %v1754
        %v1756 = vpop.f32.mrf.mxu0
        %v1757 = vadd.f32 %v1676, %v1756
        %1758 = vmatmul.bf16.gmra.mxu0 %v1702
        %v1759 = vpop.f32.mrf.mxu0
        %v1760 = vadd.f32 %v1676, %v1759
        %v1761 = vpop.f32.mrf.mxu0
        %v1762 = vadd.f32 %v1676, %v1761
        %1763 = vmatmul.bf16.gmra.mxu0 %v1704
        %v1764 = vpop.f32.mrf.mxu0
        %v1765 = vadd.f32 %v1676, %v1764
        %v1766 = vpop.f32.mrf.mxu0
        %v1767 = vadd.f32 %v1676, %v1766
        %1768 = vmatmul.bf16.gmra.mxu0 %v1706
        %v1769 = vpop.f32.mrf.mxu0
        %v1770 = vadd.f32 %v1676, %v1769
        %v1771 = vpop.f32.mrf.mxu0
        %v1772 = vadd.f32 %v1676, %v1771
        %1773 = vmatmul.bf16.gmra.mxu0 %v1708
        %v1774 = vpop.f32.mrf.mxu0
        %v1775 = vadd.f32 %v1676, %v1774
        %v1776 = vpop.f32.mrf.mxu0
        %v1777 = vadd.f32 %v1676, %v1776
        %1778 = vmatmul.bf16.gmra.mxu0 %v1710
        %v1779 = vpop.f32.mrf.mxu0
        %v1780 = vadd.f32 %v1676, %v1779
        %v1781 = vpop.f32.mrf.mxu0
        %v1782 = vadd.f32 %v1676, %v1781
        %1783 = vmatmul.bf16.gmra.mxu0 %v1712
        %v1784 = vpop.f32.mrf.mxu0
        %v1785 = vadd.f32 %v1676, %v1784
        %v1786 = vpop.f32.mrf.mxu0
        %v1787 = vadd.f32 %v1676, %v1786
        %1788 = vmatmul.bf16.gmra.mxu0 %v1714
        %v1789 = vpop.f32.mrf.mxu0
        %v1790 = vadd.f32 %v1676, %v1789
        %v1791 = vpop.f32.mrf.mxu0
        %v1792 = vadd.f32 %v1676, %v1791
        %1793 = vmatmul.bf16.gmra.mxu0 %v1716
        %v1794 = vpop.f32.mrf.mxu0
        %v1795 = vadd.f32 %v1676, %v1794
        %v1796 = vpop.f32.mrf.mxu0
        %v1797 = vadd.f32 %v1676, %v1796
        %1798 = vmatmul.bf16.gmra.mxu0 %v1718
        %v1799 = vpop.f32.mrf.mxu0
        %v1800 = vadd.f32 %v1676, %v1799
        %v1801 = vpop.f32.mrf.mxu0
        %v1802 = vadd.f32 %v1676, %v1801
        %1803 = vmatmul.bf16.gmra.mxu0 %v1720
        %v1804 = vpop.f32.mrf.mxu0
        %v1805 = vadd.f32 %v1676, %v1804
        %v1806 = vpop.f32.mrf.mxu0
        %v1807 = vadd.f32 %v1676, %v1806
        %1808 = vmatmul.bf16.gmra.mxu0 %v1722
        %v1809 = vpop.f32.mrf.mxu0
        %v1810 = vadd.f32 %v1676, %v1809
        %v1811 = vpop.f32.mrf.mxu0
        %v1812 = vadd.f32 %v1676, %v1811
        %1813 = vmatmul.bf16.gmra.mxu0 %v1724
        %v1814 = vpop.f32.mrf.mxu0
        %v1815 = vadd.f32 %v1676, %v1814
        %v1816 = vpop.f32.mrf.mxu0
        %v1817 = vadd.f32 %v1676, %v1816
        %1818 = vdwg.mxu0
        %v1819 = vmax.f32 %v1740, 0.0
        %v1820 = vmax.f32 %v1742, 0.0
        %v1821 = vmax.f32 %v1745, 0.0
        %v1822 = vmax.f32 %v1747, 0.0
        %v1823 = vmax.f32 %v1750, 0.0
        %v1824 = vmax.f32 %v1752, 0.0
        %v1825 = vmax.f32 %v1755, 0.0
        %v1826 = vmax.f32 %v1757, 0.0
        %v1827 = vmax.f32 %v1760, 0.0
        %v1828 = vmax.f32 %v1762, 0.0
        %v1829 = vmax.f32 %v1765, 0.0
        %v1830 = vmax.f32 %v1767, 0.0
        %v1831 = vmax.f32 %v1770, 0.0
        %v1832 = vmax.f32 %v1772, 0.0
        %v1833 = vmax.f32 %v1775, 0.0
        %v1834 = vmax.f32 %v1777, 0.0
        %v1835 = vmax.f32 %v1780, 0.0
        %v1836 = vmax.f32 %v1782, 0.0
        %v1837 = vmax.f32 %v1785, 0.0
        %v1838 = vmax.f32 %v1787, 0.0
        %v1839 = vmax.f32 %v1790, 0.0
        %v1840 = vmax.f32 %v1792, 0.0
        %v1841 = vmax.f32 %v1795, 0.0
        %v1842 = vmax.f32 %v1797, 0.0
        %v1843 = vmax.f32 %v1800, 0.0
        %v1844 = vmax.f32 %v1802, 0.0
        %v1845 = vmax.f32 %v1805, 0.0
        %v1846 = vmax.f32 %v1807, 0.0
        %v1847 = vmax.f32 %v1810, 0.0
        %v1848 = vmax.f32 %v1812, 0.0
        %v1849 = vmax.f32 %v1815, 0.0
        %v1850 = vmax.f32 %v1817, 0.0
        %v1851 = vpack.c.bf16 %v1820, %v1819
        %v1852 = vpack.c.bf16 %v1822, %v1821
        %v1853 = vpack.c.bf16 %v1824, %v1823
        %v1854 = vpack.c.bf16 %v1826, %v1825
        %v1855 = vpack.c.bf16 %v1828, %v1827
        %v1856 = vpack.c.bf16 %v1830, %v1829
        %v1857 = vpack.c.bf16 %v1832, %v1831
        %v1858 = vpack.c.bf16 %v1834, %v1833
        %v1859 = vpack.c.bf16 %v1836, %v1835
        %v1860 = vpack.c.bf16 %v1838, %v1837
        %v1861 = vpack.c.bf16 %v1840, %v1839
        %v1862 = vpack.c.bf16 %v1842, %v1841
        %v1863 = vpack.c.bf16 %v1844, %v1843
        %v1864 = vpack.c.bf16 %v1846, %v1845
        %v1865 = vpack.c.bf16 %v1848, %v1847
        %v1866 = vpack.c.bf16 %v1850, %v1849
        %v1867 = vld [vmem:[%s5] sm:$0x3]
        %v1868 = vld [vmem:[%s6] sm:$0x1]
        %v1870 = vperm.slane %v1868, 0
        %v1873 = vsel %vm1390, %v1851, 0
        %v1876 = vsel %vm1390, %v1852, 0
        %v1879 = vsel %vm1390, %v1853, 0
        %v1882 = vsel %vm1390, %v1854, 0
        %v1885 = vsel %vm1390, %v1855, 0
        %v1888 = vsel %vm1390, %v1856, 0
        %v1891 = vsel %vm1390, %v1857, 0
        %v1894 = vsel %vm1390, %v1858, 0
        %v1897 = vsel %vm1390, %v1859, 0
        %v1900 = vsel %vm1390, %v1860, 0
        %v1903 = vsel %vm1390, %v1861, 0
        %v1906 = vsel %vm1390, %v1862, 0
        %v1909 = vsel %vm1390, %v1863, 0
        %v1912 = vsel %vm1390, %v1864, 0
        %v1915 = vsel %vm1390, %v1865, 0
        %v1918 = vsel %vm1390, %v1866, 0
        %v1921 = vsel %vm1726, %v1867, 0
        %1923 = vmatpush.bf16.msra.mxu0 0
        %1924 = vmatpush.bf16.msra.mxu0 0
        %1925 = vmatpush.bf16.msra.mxu0 0
        %1926 = vmatpush.bf16.msra.mxu0 0
        %1927 = vmatpush.bf16.msra.mxu0 0
        %1928 = vmatpush.bf16.msra.mxu0 0
        %1929 = vmatpush.bf16.msra.mxu0 0
        %1930 = vmatpush.bf16.msra.mxu0 %v1921
        %1931 = vmatmul.bf16.gmra.mxu0 %v1873
        %v1932 = vpop.f32.mrf.mxu0
        %v1933 = vadd.f32 %v1870, %v1932
        %v1934 = vpop.f32.mrf.mxu0
        %v1935 = vadd.f32 %v1870, %v1934
        %1936 = vmatmul.bf16.gmra.mxu0 %v1876
        %v1937 = vpop.f32.mrf.mxu0
        %v1938 = vadd.f32 %v1870, %v1937
        %v1939 = vpop.f32.mrf.mxu0
        %v1940 = vadd.f32 %v1870, %v1939
        %1941 = vmatmul.bf16.gmra.mxu0 %v1879
        %v1942 = vpop.f32.mrf.mxu0
        %v1943 = vadd.f32 %v1870, %v1942
        %v1944 = vpop.f32.mrf.mxu0
        %v1945 = vadd.f32 %v1870, %v1944
        %1946 = vmatmul.bf16.gmra.mxu0 %v1882
        %v1947 = vpop.f32.mrf.mxu0
        %v1948 = vadd.f32 %v1870, %v1947
        %v1949 = vpop.f32.mrf.mxu0
        %v1950 = vadd.f32 %v1870, %v1949
        %1951 = vmatmul.bf16.gmra.mxu0 %v1885
        %v1952 = vpop.f32.mrf.mxu0
        %v1953 = vadd.f32 %v1870, %v1952
        %v1954 = vpop.f32.mrf.mxu0
        %v1955 = vadd.f32 %v1870, %v1954
        %1956 = vmatmul.bf16.gmra.mxu0 %v1888
        %v1957 = vpop.f32.mrf.mxu0
        %v1958 = vadd.f32 %v1870, %v1957
        %v1959 = vpop.f32.mrf.mxu0
        %v1960 = vadd.f32 %v1870, %v1959
        %1961 = vmatmul.bf16.gmra.mxu0 %v1891
        %v1962 = vpop.f32.mrf.mxu0
        %v1963 = vadd.f32 %v1870, %v1962
        %v1964 = vpop.f32.mrf.mxu0
        %v1965 = vadd.f32 %v1870, %v1964
        %1966 = vmatmul.bf16.gmra.mxu0 %v1894
        %v1967 = vpop.f32.mrf.mxu0
        %v1968 = vadd.f32 %v1870, %v1967
        %v1969 = vpop.f32.mrf.mxu0
        %v1970 = vadd.f32 %v1870, %v1969
        %1971 = vmatmul.bf16.gmra.mxu0 %v1897
        %v1972 = vpop.f32.mrf.mxu0
        %v1973 = vadd.f32 %v1870, %v1972
        %v1974 = vpop.f32.mrf.mxu0
        %v1975 = vadd.f32 %v1870, %v1974
        %1976 = vmatmul.bf16.gmra.mxu0 %v1900
        %v1977 = vpop.f32.mrf.mxu0
        %v1978 = vadd.f32 %v1870, %v1977
        %v1979 = vpop.f32.mrf.mxu0
        %v1980 = vadd.f32 %v1870, %v1979
        %1981 = vmatmul.bf16.gmra.mxu0 %v1903
        %v1982 = vpop.f32.mrf.mxu0
        %v1983 = vadd.f32 %v1870, %v1982
        %v1984 = vpop.f32.mrf.mxu0
        %v1985 = vadd.f32 %v1870, %v1984
        %1986 = vmatmul.bf16.gmra.mxu0 %v1906
        %v1987 = vpop.f32.mrf.mxu0
        %v1988 = vadd.f32 %v1870, %v1987
        %v1989 = vpop.f32.mrf.mxu0
        %v1990 = vadd.f32 %v1870, %v1989
        %1991 = vmatmul.bf16.gmra.mxu0 %v1909
        %v1992 = vpop.f32.mrf.mxu0
        %v1993 = vadd.f32 %v1870, %v1992
        %v1994 = vpop.f32.mrf.mxu0
        %v1995 = vadd.f32 %v1870, %v1994
        %1996 = vmatmul.bf16.gmra.mxu0 %v1912
        %v1997 = vpop.f32.mrf.mxu0
        %v1998 = vadd.f32 %v1870, %v1997
        %v1999 = vpop.f32.mrf.mxu0
        %v2000 = vadd.f32 %v1870, %v1999
        %2001 = vmatmul.bf16.gmra.mxu0 %v1915
        %v2002 = vpop.f32.mrf.mxu0
        %v2003 = vadd.f32 %v1870, %v2002
        %v2004 = vpop.f32.mrf.mxu0
        %v2005 = vadd.f32 %v1870, %v2004
        %2006 = vmatmul.bf16.gmra.mxu0 %v1918
        %v2007 = vpop.f32.mrf.mxu0
        %v2008 = vadd.f32 %v1870, %v2007
        %v2009 = vpop.f32.mrf.mxu0
        %v2010 = vadd.f32 %v1870, %v2009
        %2011 = vdwg.mxu0
        %v2012 = vunpack.c.l.bf16 %v300
        %v2013 = vunpack.c.l.bf16 %v301
        %v2014 = vunpack.c.l.bf16 %v302
        %v2015 = vunpack.c.l.bf16 %v303
        %v2016 = vunpack.c.l.bf16 %v304
        %v2017 = vunpack.c.l.bf16 %v305
        %v2018 = vunpack.c.l.bf16 %v306
        %v2019 = vunpack.c.l.bf16 %v307
        %v2020 = vunpack.c.l.bf16 %v308
        %v2021 = vunpack.c.l.bf16 %v309
        %v2022 = vunpack.c.l.bf16 %v310
        %v2023 = vunpack.c.l.bf16 %v311
        %v2024 = vunpack.c.l.bf16 %v312
        %v2025 = vunpack.c.l.bf16 %v313
        %v2026 = vunpack.c.l.bf16 %v314
        %v2027 = vunpack.c.l.bf16 %v315
        %v2028 = vunpack.c.l.bf16 %v316
        %v2029 = vunpack.c.l.bf16 %v317
        %v2030 = vunpack.c.l.bf16 %v318
        %v2031 = vunpack.c.l.bf16 %v319
        %v2032 = vunpack.c.l.bf16 %v320
        %v2033 = vunpack.c.l.bf16 %v321
        %v2034 = vunpack.c.l.bf16 %v322
        %v2035 = vunpack.c.l.bf16 %v323
        %v2036 = vunpack.c.l.bf16 %v324
        %v2037 = vunpack.c.l.bf16 %v325
        %v2038 = vunpack.c.l.bf16 %v326
        %v2039 = vunpack.c.l.bf16 %v327
        %v2040 = vunpack.c.l.bf16 %v328
        %v2041 = vunpack.c.l.bf16 %v329
        %v2042 = vunpack.c.l.bf16 %v330
        %v2043 = vunpack.c.l.bf16 %v331
        %v2044 = vadd.f32 %v1933, %v2012
        %v2045 = vadd.f32 %v1935, %v2013
        %v2046 = vadd.f32 %v1938, %v2014
        %v2047 = vadd.f32 %v1940, %v2015
        %v2048 = vadd.f32 %v1943, %v2016
        %v2049 = vadd.f32 %v1945, %v2017
        %v2050 = vadd.f32 %v1948, %v2018
        %v2051 = vadd.f32 %v1950, %v2019
        %v2052 = vadd.f32 %v1953, %v2020
        %v2053 = vadd.f32 %v1955, %v2021
        %v2054 = vadd.f32 %v1958, %v2022
        %v2055 = vadd.f32 %v1960, %v2023
        %v2056 = vadd.f32 %v1963, %v2024
        %v2057 = vadd.f32 %v1965, %v2025
        %v2058 = vadd.f32 %v1968, %v2026
        %v2059 = vadd.f32 %v1970, %v2027
        %v2060 = vadd.f32 %v1973, %v2028
        %v2061 = vadd.f32 %v1975, %v2029
        %v2062 = vadd.f32 %v1978, %v2030
        %v2063 = vadd.f32 %v1980, %v2031
        %v2064 = vadd.f32 %v1983, %v2032
        %v2065 = vadd.f32 %v1985, %v2033
        %v2066 = vadd.f32 %v1988, %v2034
        %v2067 = vadd.f32 %v1990, %v2035
        %v2068 = vadd.f32 %v1993, %v2036
        %v2069 = vadd.f32 %v1995, %v2037
        %v2070 = vadd.f32 %v1998, %v2038
        %v2071 = vadd.f32 %v2000, %v2039
        %v2072 = vadd.f32 %v2003, %v2040
        %v2073 = vadd.f32 %v2005, %v2041
        %v2074 = vadd.f32 %v2008, %v2042
        %v2075 = vadd.f32 %v2010, %v2043
        %v2076 = vmax.f32 %v2044, 0.0
        %v2077 = vmax.f32 %v2045, 0.0
        %v2078 = vmax.f32 %v2046, 0.0
        %v2079 = vmax.f32 %v2047, 0.0
        %v2080 = vmax.f32 %v2048, 0.0
        %v2081 = vmax.f32 %v2049, 0.0
        %v2082 = vmax.f32 %v2050, 0.0
        %v2083 = vmax.f32 %v2051, 0.0
        %v2084 = vmax.f32 %v2052, 0.0
        %v2085 = vmax.f32 %v2053, 0.0
        %v2086 = vmax.f32 %v2054, 0.0
        %v2087 = vmax.f32 %v2055, 0.0
        %v2088 = vmax.f32 %v2056, 0.0
        %v2089 = vmax.f32 %v2057, 0.0
        %v2090 = vmax.f32 %v2058, 0.0
        %v2091 = vmax.f32 %v2059, 0.0
        %v2092 = vmax.f32 %v2060, 0.0
        %v2093 = vmax.f32 %v2061, 0.0
        %v2094 = vmax.f32 %v2062, 0.0
        %v2095 = vmax.f32 %v2063, 0.0
        %v2096 = vmax.f32 %v2064, 0.0
        %v2097 = vmax.f32 %v2065, 0.0
        %v2098 = vmax.f32 %v2066, 0.0
        %v2099 = vmax.f32 %v2067, 0.0
        %v2100 = vmax.f32 %v2068, 0.0
        %v2101 = vmax.f32 %v2069, 0.0
        %v2102 = vmax.f32 %v2070, 0.0
        %v2103 = vmax.f32 %v2071, 0.0
        %v2104 = vmax.f32 %v2072, 0.0
        %v2105 = vmax.f32 %v2073, 0.0
        %v2106 = vmax.f32 %v2074, 0.0
        %v2107 = vmax.f32 %v2075, 0.0
        %2108 = vst.msk [vmem:[%s298] sm:$0xff] %vm424, %v2076
        %2109 = vst.msk [vmem:[%s298 + $0x8] sm:$0xff] %vm424, %v2077
        %2110 = vst.msk [vmem:[%s298 + $0x10] sm:$0xff] %vm424, %v2078
        %2111 = vst.msk [vmem:[%s298 + $0x18] sm:$0xff] %vm424, %v2079
        %2112 = vst.msk [vmem:[%s298 + $0x20] sm:$0xff] %vm424, %v2080
        %2113 = vst.msk [vmem:[%s298 + $0x28] sm:$0xff] %vm424, %v2081
        %2114 = vst.msk [vmem:[%s298 + $0x30] sm:$0xff] %vm424, %v2082
        %2115 = vst.msk [vmem:[%s298 + $0x38] sm:$0xff] %vm424, %v2083
        %2116 = vst.msk [vmem:[%s298 + $0x40] sm:$0xff] %vm424, %v2084
        %2117 = vst.msk [vmem:[%s298 + $0x48] sm:$0xff] %vm424, %v2085
        %2118 = vst.msk [vmem:[%s298 + $0x50] sm:$0xff] %vm424, %v2086
        %2119 = vst.msk [vmem:[%s298 + $0x58] sm:$0xff] %vm424, %v2087
        %2120 = vst.msk [vmem:[%s298 + $0x60] sm:$0xff] %vm424, %v2088
        %2121 = vst.msk [vmem:[%s298 + $0x68] sm:$0xff] %vm424, %v2089
        %2122 = vst.msk [vmem:[%s298 + $0x70] sm:$0xff] %vm424, %v2090
        %2123 = vst.msk [vmem:[%s298 + $0x78] sm:$0xff] %vm424, %v2091
        %2124 = vst.msk [vmem:[%s298 + $0x80] sm:$0xff] %vm424, %v2092
        %2125 = vst.msk [vmem:[%s298 + $0x88] sm:$0xff] %vm424, %v2093
        %2126 = vst.msk [vmem:[%s298 + $0x90] sm:$0xff] %vm424, %v2094
        %2127 = vst.msk [vmem:[%s298 + $0x98] sm:$0xff] %vm424, %v2095
        %2128 = vst.msk [vmem:[%s298 + $0xa0] sm:$0xff] %vm424, %v2096
        %2129 = vst.msk [vmem:[%s298 + $0xa8] sm:$0xff] %vm424, %v2097
        %2130 = vst.msk [vmem:[%s298 + $0xb0] sm:$0xff] %vm424, %v2098
        %2131 = vst.msk [vmem:[%s298 + $0xb8] sm:$0xff] %vm424, %v2099
        %2132 = vst.msk [vmem:[%s298 + $0xc0] sm:$0xff] %vm424, %v2100
        %2133 = vst.msk [vmem:[%s298 + $0xc8] sm:$0xff] %vm424, %v2101
        %2134 = vst.msk [vmem:[%s298 + $0xd0] sm:$0xff] %vm424, %v2102
        %2135 = vst.msk [vmem:[%s298 + $0xd8] sm:$0xff] %vm424, %v2103
        %2136 = vst.msk [vmem:[%s298 + $0xe0] sm:$0xff] %vm424, %v2104
        %2137 = vst.msk [vmem:[%s298 + $0xe8] sm:$0xff] %vm424, %v2105
        %2138 = vst.msk [vmem:[%s298 + $0xf0] sm:$0xff] %vm424, %v2106
        %2139 = vst.msk [vmem:[%s298 + $0xf8] sm:$0xff] %vm424, %v2107
        %s2140 = sand.u32 %s184, 1
        %s2141 = scalar_lea.sflag [#allocation4], %s2140
        %s2142 = sand.u32 %s184, 1
        %s2143 = smul.addr %s2142, 256
        %s2144 = scalar_lea.vmem [#allocation5], %s2143
        // Predicated region
        $region53: #{tpu_custom_call.1} parent=47 // pred_check
          %p2145 = pneg %p194
        $region54: #{tpu_custom_call.1} parent=47 // pred_check_branch
          %2147 = sbr.rel (%p2145) target = $region56
        $region55: #{tpu_custom_call.1} parent=47 // pred_region
          %2149 = vsyncadd %s2141, 0
          %s2150 = smul.addr %s24, 32
          %s2151 = smul.addr %s2150, 8
          %s2152 = scalar_lea.hbm %s7, %s2151
          %s2153 = sshll.u32 %s2144, 4
          %s2154 = int_to_ptr.vmem [resolvable:$true] %s2153
          %s2155 = sshll.u32 %s2152, 4
          %s2156 = int_to_ptr.hbm [resolvable:$true] %s2155
          %2161 = dma.vmem_to_hbm [thread:$0]  %s2154, 4096, %s2156, %s2141, 128, 128, 8
        $region56: #{tpu_custom_call.1} parent=47 // pred_fallthru
          _
      $region48: #{tpu_custom_call.1} parent=5 // pred_fallthru
        _
      %p2162 = scmp.le.s32.totalorder 2, %s19
      // Predicated region
      $region57: #{tpu_custom_call.1} parent=5 // pred_check
        %p2163 = pneg %p2162
      $region58: #{tpu_custom_call.1} parent=5 // pred_check_branch
        %2165 = sbr.rel (%p2163) target = $region60
      $region59: #{tpu_custom_call.1} parent=5 // pred_region
        %s2166 = ssub.s32 %s19, 2
        // Predicated region
        $region61: #{tpu_custom_call.1} parent=59 // pred_check
          %p2167 = pneg %p200
        $region62: #{tpu_custom_call.1} parent=59 // pred_check_branch
          %2169 = sbr.rel (%p2167) target = $region64
        $region63: #{tpu_custom_call.1} parent=59 // pred_region
          %s2170 = sand.u32 %s185, 1
          %s2171 = scalar_lea.sflag [#allocation4], %s2170
          %s2172 = sand.u32 %s185, 1
          %s2173 = smul.addr %s2172, 256
          %s2174 = scalar_lea.vmem [#allocation5], %s2173
          %2176 = dma.done %s2171, 4096
        $region64: #{tpu_custom_call.1} parent=59 // pred_fallthru
          _
      $region60: #{tpu_custom_call.1} parent=5 // pred_fallthru
        _
    $region6: #{tpu_custom_call.1} parent=1 // loop_footer
      %s23 = sadd.s32 1, %s19
    $region7: #{tpu_custom_call.1} parent=1 // loop_footer_branch
      %18 = sbr.rel target = $region3
    $region8: #{tpu_custom_call.1} parent=1 // loop_exit
      _
    %2177 = vsyncpa [#allocation3], 1
    %s2178 = scalar_lea.sflag [#allocation3], 1
    %2179 = vsyncpa %s2178, 1
    %2180 = vsyncpa [#allocation4], 1
    %s2181 = scalar_lea.sflag [#allocation4], 1
    %2182 = vsyncpa %s2181, 1

</llo_original>
